<compile_context>
chip_gen: v7x
topology: tpu7x:2x2x1
jax: 0.10.0
libtpu: 0.0.40
codegen_flags: <defaults>
</compile_context>

<pallas_src>
import functools

import jax
import jax.numpy as jnp
from jax import lax
from jax.experimental import pallas as pl
from jax.experimental.pallas import tpu as pltpu


def _soft_contrastive_kernel(e1_ref, e2_ref, out_ref, *, alpha, margin,
                             max_violation, threshold_hetero, threshold_homo,
                             precision):
    e1 = e1_ref[0]                        # (N, D), native dtype -> MXU
    e2 = e2_ref[0]
    n = e1.shape[0]

    def dot_nt(a, b):
        # a @ b^T without materializing b^T (contract last dim of both).
        return lax.dot_general(
            a, b, dimension_numbers=(((1,), (1,)), ((), ())),
            precision=precision, preferred_element_type=jnp.float32)

    s = dot_nt(e1, e2)                    # S[i,j] = <e1_i, e2_j>, (N,N) f32

    # identity mask (torch.eye(N) > 0.5); also the (N,1)->(1,N) relayout tool
    row = lax.broadcasted_iota(jnp.int32, (n, n), 0)
    col = lax.broadcasted_iota(jnp.int32, (n, n), 1)
    eye = row == col

    # Exact f32 diagonals via VPU row-dots (faithful to the all-f32 PyTorch
    # module even when the NxN matmuls run at reduced MXU precision).
    e1f = e1.astype(jnp.float32)
    e2f = e2.astype(jnp.float32)
    diag_s = jnp.sum(e1f * e2f, axis=1, keepdims=True)        # (N, 1)

    one_eps = 1.0 - 1e-6

    if max_violation:
        a_self = dot_nt(e1, e1)           # symmetric (N,N)
        b_self = dot_nt(e2, e2)           # symmetric (N,N)

        # hoisted shared compares (one "< 1-1e-6" per matrix, not two)
        lt_a = a_self < one_eps
        lt_b = b_self < one_eps
        m_a_het = (a_self > threshold_hetero) & lt_a
        m_a_hom = (a_self > threshold_homo) & lt_a
        m_b_het = (b_self > threshold_hetero) & lt_b
        m_b_hom = (b_self > threshold_homo) & lt_b

        # direction 1: compute(e1, e2) -> mask = hetero(A) | homo(B)
        # direction 2: compute(e2, e1) -> its score matrix is S^T and its
        #              mask  = hetero(B) | homo(A) (symmetric), so we keep
        #              everything transposed and never materialize S^T.
        masked1 = jnp.where(m_a_het | m_b_hom, 0.0, s)
        masked2t = jnp.where(m_b_het | m_a_hom, 0.0, s)

        # Diagonal of each mask from exact f32 self row-dots (these values sit
        # near 1.0 for normalized embeddings, i.e. right at the (x < 1-1e-6)
        # boundary -- keep them exact in every matmul-precision mode).
        diag_a = jnp.sum(e1f * e1f, axis=1, keepdims=True)     # (N, 1)
        diag_b = jnp.sum(e2f * e2f, axis=1, keepdims=True)     # (N, 1)
        lt_da = diag_a < one_eps
        lt_db = diag_b < one_eps
        md1 = (((diag_a > threshold_hetero) & lt_da) |
               ((diag_b > threshold_homo) & lt_db))
        md2 = (((diag_b > threshold_hetero) & lt_db) |
               ((diag_a > threshold_homo) & lt_da))

        diag1 = jnp.where(md1, 0.0, diag_s)                    # (N, 1) dir-1
        diag2_col = jnp.where(md2, 0.0, diag_s)                # (N, 1) dir-2

        # dir-2 needs its diagonal lane-oriented (1,N): relayout the (N,1)
        # column with a single eye-select + sublane reduce.
        # TODO(synk): replace with a proper transpose/einshape in a future
        # multi-tile (large-N) version.
        diag2 = jnp.sum(jnp.where(eye, diag2_col, 0.0), axis=0, keepdims=True)

        cost1 = jnp.maximum(margin + masked1 - diag1, 0.0)     # row-bcast diag
        cost1 = jnp.where(eye, 0.0, cost1)
        cost1 = jnp.max(cost1, axis=1, keepdims=True)          # (N, 1)

        cost2 = jnp.maximum(margin + masked2t - diag2, 0.0)    # col-bcast diag
        cost2 = jnp.where(eye, 0.0, cost2)
        cost2 = jnp.max(cost2, axis=0, keepdims=True)          # (1, N)
    else:
        # dir-2 diagonal, lane-oriented (1,N), from the same exact diag_s.
        diag2 = jnp.sum(jnp.where(eye, diag_s, 0.0), axis=0, keepdims=True)
        cost1 = jnp.where(eye, 0.0, jnp.maximum(margin + s - diag_s, 0.0))
        cost2 = jnp.where(eye, 0.0, jnp.maximum(margin + s - diag2, 0.0))

    total = alpha * (jnp.sum(cost1, keepdims=True) +
                     jnp.sum(cost2, keepdims=True))            # (1, 1) f32
    out_ref[0] = total.astype(jnp.float32)


def soft_contrastive_loss_batched(motion_emb, text_emb, *, alpha, margin=0.0,
                                  max_violation=False, threshold_hetero=1.0,
                                  threshold_homo=1.0,
                                  precision=lax.Precision.DEFAULT):
    """Losses for a batch of independent (motion, text) pairs: (B,N,D) -> (B,)."""
    assert motion_emb.shape == text_emb.shape and motion_emb.ndim == 3
    b, n, d = motion_emb.shape

    kernel = functools.partial(
        _soft_contrastive_kernel,
        alpha=float(alpha), margin=float(margin),
        max_violation=bool(max_violation),
        threshold_hetero=float(threshold_hetero),
        threshold_homo=float(threshold_homo),
        precision=precision,
    )

    out = pl.pallas_call(
        kernel,
        out_shape=jax.ShapeDtypeStruct((b, 1, 1), jnp.float32),
        grid=(b,),
        in_specs=[
            pl.BlockSpec((1, n, d), lambda i: (i, 0, 0)),
            pl.BlockSpec((1, n, d), lambda i: (i, 0, 0)),
        ],
        out_specs=pl.BlockSpec((1, 1, 1), lambda i: (i, 0, 0)),
        compiler_params=pltpu.CompilerParams(
            dimension_semantics=("parallel",)),
    )(motion_emb, text_emb)
    return out[:, 0, 0]


def soft_contrastive_loss(motion_emb, text_emb, **kwargs):
    """Pallas equivalent of SoftContrastiveLoss.forward(motion_emb, text_emb)."""
    return soft_contrastive_loss_batched(
        motion_emb[None], text_emb[None], **kwargs)[0]


def _reference(motion_emb, text_emb, *, alpha, margin, max_violation,
               threshold_hetero, threshold_homo):
    """Pure-JAX reference mirroring the PyTorch module (all-f32 matmuls)."""
    hp = lax.Precision.HIGHEST

    def sim(a, b):
        return jnp.matmul(a, b.T, precision=hp)

    def compute(a, b):
        scores = sim(a, b)
        if max_violation:
            s_a, s_b = sim(a, a), sim(b, b)
            m_a = (s_a > threshold_hetero) & (s_a < 1 - 1e-6)
            m_b = (s_b > threshold_homo) & (s_b < 1 - 1e-6)
            scores = jnp.where(m_a | m_b, 0.0, scores)
        dg = jnp.diag(scores)[:, None]
        cost = jnp.maximum(margin + scores - dg, 0.0)
        cost = jnp.where(jnp.eye(scores.shape[0], dtype=bool), 0.0, cost)
        if max_violation:
            cost = cost.max(axis=1)
        return alpha * cost.sum()

    return compute(motion_emb, text_emb) + compute(text_emb, motion_emb)


if __name__ == "__main__":
    # Module hyper-parameters (constructor args)
    alpha = 0.5
    margin = 0.2
    threshold_hetero = 0.7
    threshold_homo = 0.8

    # Batch of B=4 independent (N=8, D=32) pairs, L2-normalized then scaled so
    # the self-similarity diagonals stay well away from the discontinuous
    # (x > threshold) & (x < 1-1e-6) boundaries while still exercising
    # masked / partially-masked / unmasked diagonal cases.
    B, N, D = 4, 8, 32
    key = jax.random.PRNGKey(0)
    k1, k2 = jax.random.split(key)
    motion = jax.random.normal(k1, (B, N, D), dtype=jnp.float32)
    text = jax.random.normal(k2, (B, N, D), dtype=jnp.float32)
    motion = motion / jnp.linalg.norm(motion, axis=-1, keepdims=True)
    text = text / jnp.linalg.norm(text, axis=-1, keepdims=True)
    m_scale = jnp.asarray([0.95, 0.90, 0.85, 0.80], jnp.float32)
    t_scale = jnp.asarray([0.90, 0.80, 0.95, 0.85], jnp.float32)
    motion = motion * m_scale[:, None, None]
    text = text * t_scale[:, None, None]

    for max_violation in (True, False):
        common = dict(alpha=alpha, margin=margin, max_violation=max_violation,
                      threshold_hetero=threshold_hetero,
                      threshold_homo=threshold_homo)

        # All-f32 reference mirroring the PyTorch module, per pair.
        ref = jnp.stack([_reference(motion[i], text[i], **common)
                         for i in range(B)])
        ref = jax.block_until_ready(ref)

        # 1) Exact (HIGHEST) MXU path: must match the f32 reference tightly.
        exact = soft_contrastive_loss_batched(
            motion, text, precision=lax.Precision.HIGHEST, **common)
        exact = jax.block_until_ready(exact)
        assert jnp.allclose(exact, ref, rtol=1e-4, atol=1e-4), (
            max_violation, exact, ref)

        # 2) Fast default-precision MXU path (review item): only small
        #    off-diagonal numeric shift vs the f32 reference.
        fast = soft_contrastive_loss_batched(motion, text, **common)
        fast = jax.block_until_ready(fast)
        assert jnp.allclose(fast, ref, rtol=2e-2, atol=2e-2), (
            max_violation, fast, ref)

        # 3) Single-pair module interface (degenerate B=1 grid).
        single = soft_contrastive_loss(
            motion[0], text[0], precision=lax.Precision.HIGHEST, **common)
        single = jax.block_until_ready(single)
        assert jnp.allclose(single, ref[0], rtol=1e-4, atol=1e-4), (
            max_violation, float(single), float(ref[0]))

    print("KERNEL_OK")
</pallas_src>

<mosaic_0001>
module attributes {stable_mosaic.version = 11 : i64} {
  func.func @_soft_contrastive_kernel(%arg0: i32, %arg1: memref<1x8x32xf32, #tpu.memory_space<vmem>>, %arg2: memref<1x8x32xf32, #tpu.memory_space<vmem>>, %arg3: memref<1x1x1xf32, #tpu.memory_space<vmem>>) attributes {dimension_semantics = [#tpu.dimension_semantics<parallel>], iteration_bounds = array<i64: 4>, scalar_prefetch = 0 : i64, scratch_operands = 0 : i64, tpu.core_type = #tpu.core_type<tc>, window_params = [{transform_indices = @transform_0, window_bounds = array<i64: 1, 8, 32>}, {transform_indices = @transform_1, window_bounds = array<i64: 1, 8, 32>}, {transform_indices = @transform_2, window_bounds = array<i64: 1, 1, 1>}]} {
    %c0 = arith.constant 0 : index
    %c0_0 = arith.constant 0 : index
    %c0_1 = arith.constant 0 : index
    %0 = vector.load %arg1[%c0, %c0_0, %c0_1] : memref<1x8x32xf32, #tpu.memory_space<vmem>>, vector<1x8x32xf32>
    %1 = vector.shape_cast %0 : vector<1x8x32xf32> to vector<8x32xf32>
    %c0_2 = arith.constant 0 : index
    %c0_3 = arith.constant 0 : index
    %c0_4 = arith.constant 0 : index
    %2 = vector.load %arg2[%c0_2, %c0_3, %c0_4] : memref<1x8x32xf32, #tpu.memory_space<vmem>>, vector<1x8x32xf32>
    %3 = vector.shape_cast %2 : vector<1x8x32xf32> to vector<8x32xf32>
    %cst = arith.constant dense<0.000000e+00> : vector<8x8xf32>
    %4 = tpu.matmul %1, %3, %cst {dimension_numbers = #tpu.dot_dimension_numbers<[1], [1], [0], [0], [0, 0, 1, 0], [], []>, precision = #tpu.contract_precision<fp32>} : vector<8x32xf32>, vector<8x32xf32>, vector<8x8xf32> -> vector<8x8xf32>
    %5 = tpu.iota {dimensions = array<i32: 0>} : vector<8x8xi32>
    %6 = tpu.iota {dimensions = array<i32: 1>} : vector<8x8xi32>
    %7 = arith.cmpi eq, %5, %6 : vector<8x8xi32>
    %8 = arith.mulf %1, %3 : vector<8x32xf32>
    %cst_5 = arith.constant dense<0.000000e+00> : vector<8xf32>
    %9 = vector.multi_reduction <add>, %8, %cst_5 [1] : vector<8x32xf32> to vector<8xf32>
    %10 = vector.shape_cast %9 : vector<8xf32> to vector<8x1xf32>
    %cst_6 = arith.constant dense<0.000000e+00> : vector<8x8xf32>
    %11 = tpu.matmul %1, %1, %cst_6 {dimension_numbers = #tpu.dot_dimension_numbers<[1], [1], [0], [0], [0, 0, 1, 0], [], []>, precision = #tpu.contract_precision<fp32>} : vector<8x32xf32>, vector<8x32xf32>, vector<8x8xf32> -> vector<8x8xf32>
    %cst_7 = arith.constant dense<0.000000e+00> : vector<8x8xf32>
    %12 = tpu.matmul %3, %3, %cst_7 {dimension_numbers = #tpu.dot_dimension_numbers<[1], [1], [0], [0], [0, 0, 1, 0], [], []>, precision = #tpu.contract_precision<fp32>} : vector<8x32xf32>, vector<8x32xf32>, vector<8x8xf32> -> vector<8x8xf32>
    %cst_8 = arith.constant 0.999998986 : f32
    %13 = vector.broadcast %cst_8 : f32 to vector<8x8xf32>
    %14 = arith.cmpf olt, %11, %13 : vector<8x8xf32>
    %cst_9 = arith.constant 0.999998986 : f32
    %15 = vector.broadcast %cst_9 : f32 to vector<8x8xf32>
    %16 = arith.cmpf olt, %12, %15 : vector<8x8xf32>
    %cst_10 = arith.constant 0.699999988 : f32
    %17 = vector.broadcast %cst_10 : f32 to vector<8x8xf32>
    %18 = arith.cmpf ogt, %11, %17 : vector<8x8xf32>
    %19 = arith.andi %18, %14 : vector<8x8xi1>
    %cst_11 = arith.constant 8.000000e-01 : f32
    %20 = vector.broadcast %cst_11 : f32 to vector<8x8xf32>
    %21 = arith.cmpf ogt, %11, %20 : vector<8x8xf32>
    %22 = arith.andi %21, %14 : vector<8x8xi1>
    %cst_12 = arith.constant 0.699999988 : f32
    %23 = vector.broadcast %cst_12 : f32 to vector<8x8xf32>
    %24 = arith.cmpf ogt, %12, %23 : vector<8x8xf32>
    %25 = arith.andi %24, %16 : vector<8x8xi1>
    %cst_13 = arith.constant 8.000000e-01 : f32
    %26 = vector.broadcast %cst_13 : f32 to vector<8x8xf32>
    %27 = arith.cmpf ogt, %12, %26 : vector<8x8xf32>
    %28 = arith.andi %27, %16 : vector<8x8xi1>
    %29 = arith.ori %19, %28 : vector<8x8xi1>
    %cst_14 = arith.constant 0.000000e+00 : f32
    %30 = vector.broadcast %cst_14 : f32 to vector<8x8xf32>
    %31 = arith.select %29, %30, %4 : vector<8x8xi1>, vector<8x8xf32>
    %32 = arith.ori %25, %22 : vector<8x8xi1>
    %cst_15 = arith.constant 0.000000e+00 : f32
    %33 = vector.broadcast %cst_15 : f32 to vector<8x8xf32>
    %34 = arith.select %32, %33, %4 : vector<8x8xi1>, vector<8x8xf32>
    %35 = arith.mulf %1, %1 : vector<8x32xf32>
    %cst_16 = arith.constant dense<0.000000e+00> : vector<8xf32>
    %36 = vector.multi_reduction <add>, %35, %cst_16 [1] : vector<8x32xf32> to vector<8xf32>
    %37 = vector.shape_cast %36 : vector<8xf32> to vector<8x1xf32>
    %38 = arith.mulf %3, %3 : vector<8x32xf32>
    %cst_17 = arith.constant dense<0.000000e+00> : vector<8xf32>
    %39 = vector.multi_reduction <add>, %38, %cst_17 [1] : vector<8x32xf32> to vector<8xf32>
    %40 = vector.shape_cast %39 : vector<8xf32> to vector<8x1xf32>
    %cst_18 = arith.constant 0.999998986 : f32
    %41 = vector.broadcast %cst_18 : f32 to vector<8x1xf32>
    %42 = arith.cmpf olt, %37, %41 : vector<8x1xf32>
    %cst_19 = arith.constant 0.999998986 : f32
    %43 = vector.broadcast %cst_19 : f32 to vector<8x1xf32>
    %44 = arith.cmpf olt, %40, %43 : vector<8x1xf32>
    %cst_20 = arith.constant 0.699999988 : f32
    %45 = vector.broadcast %cst_20 : f32 to vector<8x1xf32>
    %46 = arith.cmpf ogt, %37, %45 : vector<8x1xf32>
    %47 = arith.andi %46, %42 : vector<8x1xi1>
    %cst_21 = arith.constant 8.000000e-01 : f32
    %48 = vector.broadcast %cst_21 : f32 to vector<8x1xf32>
    %49 = arith.cmpf ogt, %40, %48 : vector<8x1xf32>
    %50 = arith.andi %49, %44 : vector<8x1xi1>
    %51 = arith.ori %47, %50 : vector<8x1xi1>
    %cst_22 = arith.constant 0.699999988 : f32
    %52 = vector.broadcast %cst_22 : f32 to vector<8x1xf32>
    %53 = arith.cmpf ogt, %40, %52 : vector<8x1xf32>
    %54 = arith.andi %53, %44 : vector<8x1xi1>
    %cst_23 = arith.constant 8.000000e-01 : f32
    %55 = vector.broadcast %cst_23 : f32 to vector<8x1xf32>
    %56 = arith.cmpf ogt, %37, %55 : vector<8x1xf32>
    %57 = arith.andi %56, %42 : vector<8x1xi1>
    %58 = arith.ori %54, %57 : vector<8x1xi1>
    %cst_24 = arith.constant 0.000000e+00 : f32
    %59 = vector.broadcast %cst_24 : f32 to vector<8x1xf32>
    %60 = arith.select %51, %59, %10 : vector<8x1xi1>, vector<8x1xf32>
    %cst_25 = arith.constant 0.000000e+00 : f32
    %61 = vector.broadcast %cst_25 : f32 to vector<8x1xf32>
    %62 = arith.select %58, %61, %10 : vector<8x1xi1>, vector<8x1xf32>
    %cst_26 = arith.constant 0.000000e+00 : f32
    %63 = vector.shape_cast %62 : vector<8x1xf32> to vector<8x1xf32>
    %64 = vector.broadcast %63 : vector<8x1xf32> to vector<8x8xf32>
    %65 = vector.broadcast %cst_26 : f32 to vector<8x8xf32>
    %66 = arith.select %7, %64, %65 : vector<8x8xi1>, vector<8x8xf32>
    %cst_27 = arith.constant dense<0.000000e+00> : vector<8xf32>
    %67 = vector.multi_reduction <add>, %66, %cst_27 [0] : vector<8x8xf32> to vector<8xf32>
    %68 = vector.shape_cast %67 : vector<8xf32> to vector<1x8xf32>
    %cst_28 = arith.constant 2.000000e-01 : f32
    %69 = vector.broadcast %cst_28 : f32 to vector<8x8xf32>
    %70 = arith.addf %69, %31 : vector<8x8xf32>
    %71 = vector.broadcast %60 : vector<8x1xf32> to vector<8x8xf32>
    %72 = arith.subf %70, %71 : vector<8x8xf32>
    %cst_29 = arith.constant 0.000000e+00 : f32
    %73 = vector.broadcast %cst_29 : f32 to vector<8x8xf32>
    %74 = arith.maximumf %72, %73 : vector<8x8xf32>
    %cst_30 = arith.constant 0.000000e+00 : f32
    %75 = vector.broadcast %cst_30 : f32 to vector<8x8xf32>
    %76 = arith.select %7, %75, %74 : vector<8x8xi1>, vector<8x8xf32>
    %cst_31 = arith.constant dense<0xFF800000> : vector<8xf32>
    %77 = vector.multi_reduction <maximumf>, %76, %cst_31 [1] : vector<8x8xf32> to vector<8xf32>
    %78 = vector.shape_cast %77 : vector<8xf32> to vector<8x1xf32>
    %cst_32 = arith.constant 2.000000e-01 : f32
    %79 = vector.broadcast %cst_32 : f32 to vector<8x8xf32>
    %80 = arith.addf %79, %34 : vector<8x8xf32>
    %81 = vector.broadcast %68 : vector<1x8xf32> to vector<8x8xf32>
    %82 = arith.subf %80, %81 : vector<8x8xf32>
    %cst_33 = arith.constant 0.000000e+00 : f32
    %83 = vector.broadcast %cst_33 : f32 to vector<8x8xf32>
    %84 = arith.maximumf %82, %83 : vector<8x8xf32>
    %cst_34 = arith.constant 0.000000e+00 : f32
    %85 = vector.broadcast %cst_34 : f32 to vector<8x8xf32>
    %86 = arith.select %7, %85, %84 : vector<8x8xi1>, vector<8x8xf32>
    %cst_35 = arith.constant dense<0xFF800000> : vector<8xf32>
    %87 = vector.multi_reduction <maximumf>, %86, %cst_35 [0] : vector<8x8xf32> to vector<8xf32>
    %88 = vector.shape_cast %87 : vector<8xf32> to vector<1x8xf32>
    %89 = vector.shape_cast %78 : vector<8x1xf32> to vector<1x8x1xf32>
    %cst_36 = arith.constant dense<0.000000e+00> : vector<1xf32>
    %90 = vector.multi_reduction <add>, %89, %cst_36 [1, 2] : vector<1x8x1xf32> to vector<1xf32>
    %91 = vector.shape_cast %90 : vector<1xf32> to vector<1x1x1xf32>
    %92 = vector.extract %91[0, 0, 0] : f32 from vector<1x1x1xf32>
    %93 = vector.broadcast %92 : f32 to vector<1x1xf32>
    %94 = vector.shape_cast %88 : vector<1x8xf32> to vector<1x1x8xf32>
    %cst_37 = arith.constant dense<0.000000e+00> : vector<1xf32>
    %95 = vector.multi_reduction <add>, %94, %cst_37 [1, 2] : vector<1x1x8xf32> to vector<1xf32>
    %96 = vector.shape_cast %95 : vector<1xf32> to vector<1x1x1xf32>
    %97 = vector.extract %96[0, 0, 0] : f32 from vector<1x1x1xf32>
    %98 = vector.broadcast %97 : f32 to vector<1x1xf32>
    %99 = arith.addf %93, %98 : vector<1x1xf32>
    %cst_38 = arith.constant 5.000000e-01 : f32
    %100 = vector.broadcast %cst_38 : f32 to vector<1x1xf32>
    %101 = arith.mulf %100, %99 : vector<1x1xf32>
    %c0_39 = arith.constant 0 : index
    %c0_40 = arith.constant 0 : index
    %c0_41 = arith.constant 0 : index
    %102 = vector.load %arg3[%c0_39, %c0_40, %c0_41] : memref<1x1x1xf32, #tpu.memory_space<vmem>>, vector<1x1x1xf32>
    %103 = vector.shape_cast %102 : vector<1x1x1xf32> to vector<1x1xf32>
    %104 = vector.shape_cast %101 : vector<1x1xf32> to vector<1x1x1xf32>
    tpu.vector_store %arg3[%c0_39, %c0_40, %c0_41], %104 {strides = array<i32>} : memref<1x1x1xf32, #tpu.memory_space<vmem>>, vector<1x1x1xf32>,
    return
  }
  func.func @transform_0(%arg0: i32) -> (i32, i32, i32) {
    %c0_i32 = arith.constant 0 : i32
    %c0_i32_0 = arith.constant 0 : i32
    %c0_i32_1 = arith.constant 0 : i32
    return %arg0, %c0_i32, %c0_i32_0 : i32, i32, i32
  }
  func.func @transform_1(%arg0: i32) -> (i32, i32, i32) {
    %c0_i32 = arith.constant 0 : i32
    %c0_i32_0 = arith.constant 0 : i32
    %c0_i32_1 = arith.constant 0 : i32
    return %arg0, %c0_i32, %c0_i32_0 : i32, i32, i32
  }
  func.func @transform_2(%arg0: i32) -> (i32, i32, i32) {
    %c0_i32 = arith.constant 0 : i32
    %c0_i32_0 = arith.constant 0 : i32
    %c0_i32_1 = arith.constant 0 : i32
    return %arg0, %c0_i32, %c0_i32_0 : i32, i32, i32
  }
}

</mosaic_0001>

<llo_original>
// kernel: tpu_custom_call.1
$region0: #{tpu_custom_call.1}
  #allocation0 [shape = 'u32[]', space=smem, size = 0x4, offset = 0x4, fixed_abs, tag = 'smem constant byte address 0x4 - core index']
  #allocation1 [shape = 'u32[144,128]{1,0:T(1,128)}', space=vmem, size = 0x12000, scoped, tag = 'internal scratch']
  %s0 = inlined_call_operand.hbm [shape: f32[4,8,32], index: 0, kind: input, shape index: {}]
  %s1 = inlined_call_operand.hbm [shape: f32[4,8,32], index: 1, kind: input, shape index: {}]
  %s2 = inlined_call_operand.vmem [shape: f32[4,1,1], index: 2, kind: output, shape index: {}]
  %s3 = sld [smem:[#allocation0]]
  $region49: #{tpu_custom_call.1} parent=0
    _
  %s5 = ssub.s32 1, %s3
  %s6 = scalar_select 0, %s5, %s3
  $region1: #{tpu_custom_call.1} parent=0
    #allocation2 [shape = 'u8[8192]{0}', space=vmem, size = 0x2000, scoped, tag = 'input window, operand 0']
    #allocation3 [shape = 's32[2]{0}', space=sflag, size = 0x8, scoped, tag = 'scoped memory for tpu_custom_call.1']
    #allocation4 [shape = 'u8[8192]{0}', space=vmem, size = 0x2000, scoped, tag = 'input window, operand 1']
    #allocation5 [shape = 's32[2]{0}', space=sflag, size = 0x8, scoped, tag = 'scoped memory for tpu_custom_call.1']
    %7 = vsyncpa [#allocation3], 0
    %s8 = scalar_lea.sflag [#allocation3], 1
    %9 = vsyncpa %s8, 0
    %10 = vsyncpa [#allocation5], 0
    %s11 = scalar_lea.sflag [#allocation5], 1
    %12 = vsyncpa %s11, 0
    loop: start=0, step=1, limit=6
    $region2: #{tpu_custom_call.1} parent=1 // loop_pre_header
      _
    $region3: #{tpu_custom_call.1} parent=1 // loop_header
      %s14 = sphi 0, %s18
      %p15 = scmp.ge.s32.totalorder %s14, 6
      %s24 = sphi 0, %s26
      %s27 = sphi 0, %s24
      %s28 = sphi 0, %s27
      %s44 = sphi 0, %s28
      %s50 = sphi 0, %s52
      %s53 = sphi 0, %s50
      %s54 = sphi 0, %s53
      %s70 = sphi 0, %s54
      %s76 = sphi 0, %s78
      %s79 = sphi 0, %s76
      %s80 = sphi 0, %s79
      %s96 = sphi 0, %s80
    $region4: #{tpu_custom_call.1} parent=1 // loop_header_branch
      %17 = sbr.rel (%p15) target = $region8
    $region5: #{tpu_custom_call.1} parent=1 // loop_body
      %s19 = ssub.s32 %s14, 1
      %s20 = ssub.s32 %s14, 2
      %s21 = sadd.s32 %s14, 1
      %s22 = ssub.s32 %s14, %s21
      %p23 = scmp.eq.s32.totalorder %s22, 0
      %s25 = sadd.s32 %s24, 1
      %s26 = scalar_select %p23, %s24, %s25
      %p29 = pneg %p23
      %p30 = scmp.eq.s32.totalorder %s14, 3
      %p31 = por %p29, %p30
      %p32 = scmp.ne.s32.totalorder %s24, %s27
      %p33 = scmp.eq.s32.totalorder %s14, 0
      %p34 = por %p32, %p33
      %p35 = scmp.ne.s32.totalorder %s24, %s27
      %p36 = scmp.eq.s32.totalorder %s19, 3
      %p37 = por %p35, %p36
      %p38 = scmp.ne.s32.totalorder %s27, %s28
      %p39 = scmp.eq.s32.totalorder %s19, 0
      %p40 = por %p38, %p39
      %p41 = scmp.ne.s32.totalorder %s27, %s28
      %p42 = scmp.eq.s32.totalorder %s20, 3
      %p43 = por %p41, %p42
      %p45 = scmp.ne.s32.totalorder %s28, %s44
      %p46 = scmp.eq.s32.totalorder %s20, 0
      %p47 = por %p45, %p46
      %s48 = ssub.s32 %s14, %s21
      %p49 = scmp.eq.s32.totalorder %s48, 0
      %s51 = sadd.s32 %s50, 1
      %s52 = scalar_select %p49, %s50, %s51
      %p55 = pneg %p49
      %p56 = scmp.eq.s32.totalorder %s14, 3
      %p57 = por %p55, %p56
      %p58 = scmp.ne.s32.totalorder %s50, %s53
      %p59 = scmp.eq.s32.totalorder %s14, 0
      %p60 = por %p58, %p59
      %p61 = scmp.ne.s32.totalorder %s50, %s53
      %p62 = scmp.eq.s32.totalorder %s19, 3
      %p63 = por %p61, %p62
      %p64 = scmp.ne.s32.totalorder %s53, %s54
      %p65 = scmp.eq.s32.totalorder %s19, 0
      %p66 = por %p64, %p65
      %p67 = scmp.ne.s32.totalorder %s53, %s54
      %p68 = scmp.eq.s32.totalorder %s20, 3
      %p69 = por %p67, %p68
      %p71 = scmp.ne.s32.totalorder %s54, %s70
      %p72 = scmp.eq.s32.totalorder %s20, 0
      %p73 = por %p71, %p72
      %s74 = ssub.s32 %s14, %s21
      %p75 = scmp.eq.s32.totalorder %s74, 0
      %s77 = sadd.s32 %s76, 1
      %s78 = scalar_select %p75, %s76, %s77
      %p81 = pneg %p75
      %p82 = scmp.eq.s32.totalorder %s14, 3
      %p83 = por %p81, %p82
      %p84 = scmp.ne.s32.totalorder %s76, %s79
      %p85 = scmp.eq.s32.totalorder %s14, 0
      %p86 = por %p84, %p85
      %p87 = scmp.ne.s32.totalorder %s76, %s79
      %p88 = scmp.eq.s32.totalorder %s19, 3
      %p89 = por %p87, %p88
      %p90 = scmp.ne.s32.totalorder %s79, %s80
      %p91 = scmp.eq.s32.totalorder %s19, 0
      %p92 = por %p90, %p91
      %p93 = scmp.ne.s32.totalorder %s79, %s80
      %p94 = scmp.eq.s32.totalorder %s20, 3
      %p95 = por %p93, %p94
      %p97 = scmp.ne.s32.totalorder %s80, %s96
      %p98 = scmp.eq.s32.totalorder %s20, 0
      %p99 = por %p97, %p98
      %p100 = scmp.le.s32.totalorder 1, %s14
      %p101 = scmp.lt.s32.totalorder %s14, 5
      %p102 = pnand %p100, %p101
      %p103 = pneg %p102
      // Predicated region
      $region9: #{tpu_custom_call.1} parent=5 // pred_check
        _
      $region10: #{tpu_custom_call.1} parent=5 // pred_check_branch
        %105 = sbr.rel (%p102) target = $region12
      $region11: #{tpu_custom_call.1} parent=5 // pred_region
        %s106 = ssub.s32 %s14, 1
      $region12: #{tpu_custom_call.1} parent=5 // pred_fallthru
        _
      %p107 = scmp.lt.s32.totalorder %s14, 4
      // Predicated region
      $region13: #{tpu_custom_call.1} parent=5 // pred_check
        %p108 = pneg %p107
      $region14: #{tpu_custom_call.1} parent=5 // pred_check_branch
        %110 = sbr.rel (%p108) target = $region16
      $region15: #{tpu_custom_call.1} parent=5 // pred_region
        // Predicated region
        $region17: #{tpu_custom_call.1} parent=15 // pred_check
          %p111 = pneg %p34
        $region18: #{tpu_custom_call.1} parent=15 // pred_check_branch
          %113 = sbr.rel (%p111) target = $region20
        $region19: #{tpu_custom_call.1} parent=15 // pred_region
          %s114 = sand.u32 %s24, 1
          %s115 = scalar_lea.sflag [#allocation3], %s114
          %s116 = sand.u32 %s24, 1
          %s117 = smul.addr %s116, 8
          %s118 = scalar_lea.vmem [#allocation2], %s117
          %s120 = ssub.s32 128, 128
          %121 = vsyncadd %s115, %s120
          %s122 = smul.addr %s14, 128
          %s123 = scalar_lea.hbm %s0, %s122
          %s125 = sshll.u32 %s118, 4
          %s126 = int_to_ptr.vmem [resolvable:$true] %s125
          %128 = dma.hbm_to_vmem [thread:$0]  %s123, 128, %s126, %s115
        $region20: #{tpu_custom_call.1} parent=15 // pred_fallthru
          _
        // Predicated region
        $region21: #{tpu_custom_call.1} parent=15 // pred_check
          %p129 = pneg %p60
        $region22: #{tpu_custom_call.1} parent=15 // pred_check_branch
          %131 = sbr.rel (%p129) target = $region24
        $region23: #{tpu_custom_call.1} parent=15 // pred_region
          %s132 = sand.u32 %s50, 1
          %s133 = scalar_lea.sflag [#allocation5], %s132
          %s134 = sand.u32 %s50, 1
          %s135 = smul.addr %s134, 8
          %s136 = scalar_lea.vmem [#allocation4], %s135
          %s138 = ssub.s32 128, 128
          %139 = vsyncadd %s133, %s138
          %s140 = smul.addr %s14, 128
          %s141 = scalar_lea.hbm %s1, %s140
          %s143 = sshll.u32 %s136, 4
          %s144 = int_to_ptr.vmem [resolvable:$true] %s143
          %146 = dma.hbm_to_vmem [thread:$0]  %s141, 128, %s144, %s133
        $region24: #{tpu_custom_call.1} parent=15 // pred_fallthru
          _
      $region16: #{tpu_custom_call.1} parent=5 // pred_fallthru
        _
      %p147 = scmp.le.s32.totalorder 1, %s14
      %p148 = scmp.lt.s32.totalorder %s14, 5
      %p149 = pnand %p147, %p148
      %p150 = pneg %p149
      // Predicated region
      $region25: #{tpu_custom_call.1} parent=5 // pred_check
        _
      $region26: #{tpu_custom_call.1} parent=5 // pred_check_branch
        %152 = sbr.rel (%p149) target = $region28
      $region27: #{tpu_custom_call.1} parent=5 // pred_region
        %s153 = ssub.s32 %s14, 1
        %s154 = sand.u32 %s27, 1
        %s155 = scalar_lea.sflag [#allocation3], %s154
        %s156 = sand.u32 %s27, 1
        %s157 = smul.addr %s156, 8
        %s158 = scalar_lea.vmem [#allocation2], %s157
        // Predicated region
        $region29: #{tpu_custom_call.1} parent=27 // pred_check
          %p159 = pneg %p40
        $region30: #{tpu_custom_call.1} parent=27 // pred_check_branch
          %161 = sbr.rel (%p159) target = $region32
        $region31: #{tpu_custom_call.1} parent=27 // pred_region
          %162 = dma.done %s155, 128
        $region32: #{tpu_custom_call.1} parent=27 // pred_fallthru
          _
        %s163 = sand.u32 %s53, 1
        %s164 = scalar_lea.sflag [#allocation5], %s163
        %s165 = sand.u32 %s53, 1
        %s166 = smul.addr %s165, 8
        %s167 = scalar_lea.vmem [#allocation4], %s166
        // Predicated region
        $region33: #{tpu_custom_call.1} parent=27 // pred_check
          %p168 = pneg %p66
        $region34: #{tpu_custom_call.1} parent=27 // pred_check_branch
          %170 = sbr.rel (%p168) target = $region36
        $region35: #{tpu_custom_call.1} parent=27 // pred_region
          %171 = dma.done %s164, 128
        $region36: #{tpu_custom_call.1} parent=27 // pred_fallthru
          _
        %s172 = sand.u32 %s27, 1
        %s173 = scalar_lea.sflag [#allocation3], %s172
        %s174 = sand.u32 %s27, 1
        %s175 = smul.addr %s174, 8
        %s176 = scalar_lea.vmem [#allocation2], %s175
        %p177 = pneg %p40
        %p178 = pneg %p37
        %s179 = sand.u32 %s53, 1
        %s180 = scalar_lea.sflag [#allocation5], %s179
        %s181 = sand.u32 %s53, 1
        %s182 = smul.addr %s181, 8
        %s183 = scalar_lea.vmem [#allocation4], %s182
        %p184 = pneg %p66
        %p185 = pneg %p63
        %p186 = pneg %p92
        %p187 = pneg %p89
        %p188 = scmp.lt.s32.totalorder %s19, 3
        %s189 = scalar_select %p188, %s19, 3
        %s190 = scalar_lea.vmem %s2, %s189
        %p191 = scmp.lt.s32.totalorder %s19, 3
        %s192 = scalar_select %p191, %s19, 3
        %s193 = scalar_lea.vmem %s2, %s192
        %v194 = vld [vmem:[%s158] sm:$0xff]
        %v195 = vld [vmem:[%s167] sm:$0xff]
        %vm196 = vcmask 261120
        %v198 = vsel %vm196, %v194, 0
        %v201 = vsel %vm196, %v195, 0
        %203 = vmatprep.subr.mxu0 0.0
        %v204 = vand.u32 %v201, 4294901760
        %205 = vmatpush1.xpose.msra.mxu0 %v204
        %206 = vmatprep.subr.mxu0 0.0
        %207 = vmatpush1.xpose.msra.mxu0 0.0
        %208 = vmatprep.subr.mxu0 0.0
        %209 = vmatpush1.xpose.msra.mxu0 0.0
        %210 = vmatprep.subr.mxu0 0.0
        %211 = vmatpush1.xpose.msra.mxu0 0.0
        %212 = vmatprep.subr.mxu0 0.0
        %213 = vmatpush1.xpose.msra.mxu0 0.0
        %214 = vmatprep.subr.mxu0 0.0
        %215 = vmatpush1.xpose.msra.mxu0 0.0
        %216 = vmatprep.subr.mxu0 0.0
        %217 = vmatpush1.xpose.msra.mxu0 0.0
        %218 = vmatprep.subr.mxu0 0.0
        %219 = vmatpush1.xpose.msra.mxu0 0.0
        %220 = vmatprep.subr.mxu0 0.0
        %221 = vmatpush1.xpose.msra.mxu0 0.0
        %222 = vmatprep.subr.mxu0 0.0
        %223 = vmatpush1.xpose.msra.mxu0 0.0
        %224 = vmatprep.subr.mxu0 0.0
        %225 = vmatpush1.xpose.msra.mxu0 0.0
        %226 = vmatprep.subr.mxu0 0.0
        %227 = vmatpush1.xpose.msra.mxu0 0.0
        %228 = vmatprep.subr.mxu0 0.0
        %229 = vmatpush1.xpose.msra.mxu0 0.0
        %230 = vmatprep.subr.mxu0 0.0
        %231 = vmatpush1.xpose.msra.mxu0 0.0
        %232 = vmatprep.subr.mxu0 0.0
        %233 = vmatpush1.xpose.msra.mxu0 0.0
        %234 = vmatprep.subr.mxu0 0.0
        %235 = vmatpush1.xpose.msra.mxu0 0.0
        %236 = vmatprep.subr.mxu0 0.0
        %237 = vmatpush1.xpose.msra.mxu0 0.0
        %238 = vmatprep.subr.mxu0 0.0
        %239 = vmatpush1.xpose.msra.mxu0 0.0
        %240 = vmatprep.subr.mxu0 0.0
        %241 = vmatpush1.xpose.msra.mxu0 0.0
        %242 = vmatprep.subr.mxu0 0.0
        %243 = vmatpush1.xpose.msra.mxu0 0.0
        %244 = vmatprep.subr.mxu0 0.0
        %245 = vmatpush1.xpose.msra.mxu0 0.0
        %246 = vmatprep.subr.mxu0 0.0
        %247 = vmatpush1.xpose.msra.mxu0 0.0
        %248 = vmatprep.subr.mxu0 0.0
        %249 = vmatpush1.xpose.msra.mxu0 0.0
        %250 = vmatprep.subr.mxu0 0.0
        %251 = vmatpush1.xpose.msra.mxu0 0.0
        %252 = vmatprep.subr.mxu0 0.0
        %253 = vmatpush1.xpose.msra.mxu0 0.0
        %254 = vmatprep.subr.mxu0 0.0
        %255 = vmatpush1.xpose.msra.mxu0 0.0
        %256 = vmatprep.subr.mxu0 0.0
        %257 = vmatpush1.xpose.msra.mxu0 0.0
        %258 = vmatprep.subr.mxu0 0.0
        %259 = vmatpush1.xpose.msra.mxu0 0.0
        %260 = vmatprep.subr.mxu0 0.0
        %261 = vmatpush1.xpose.msra.mxu0 0.0
        %262 = vmatprep.subr.mxu0 0.0
        %263 = vmatpush1.xpose.msra.mxu0 0.0
        %264 = vmatprep.subr.mxu0 0.0
        %265 = vmatpush1.xpose.msra.mxu0 0.0
        %266 = vmatprep.subr.mxu0 0.0
        %267 = vmatpush1.xpose.msra.mxu0 0.0
        %268 = vmatprep.mubr.f32.mxu0 0.0
        %v269 = vand.u32 %v198, 4294901760
        %v270 = vsub.f32 %v198, %v269
        %v271 = vand.u32 %v270, 4294901760
        %v272 = vsub.f32 %v270, %v271
        %v273 = vand.u32 %v272, 4294901760
        %274 = vmatmul.mubr.f32.gmra.mrb[0].mxu0 %v273
        %v275 = vpop.f32.mrb[0].mxu0
        %v276 = vadd.f32 0.0, %v275
        %v277 = vpop.f32.mrb[0].mxu0
        %278 = vdwg.mxu0
        %279 = vmatprep.subr.mxu0 0.0
        %v280 = vand.u32 %v201, 4294901760
        %v281 = vsub.f32 %v201, %v280
        %v282 = vand.u32 %v281, 4294901760
        %v283 = vsub.f32 %v281, %v282
        %v284 = vand.u32 %v283, 4294901760
        %285 = vmatpush1.xpose.msra.mxu0 %v284
        %286 = vmatprep.subr.mxu0 0.0
        %287 = vmatpush1.xpose.msra.mxu0 0.0
        %288 = vmatprep.subr.mxu0 0.0
        %289 = vmatpush1.xpose.msra.mxu0 0.0
        %290 = vmatprep.subr.mxu0 0.0
        %291 = vmatpush1.xpose.msra.mxu0 0.0
        %292 = vmatprep.subr.mxu0 0.0
        %293 = vmatpush1.xpose.msra.mxu0 0.0
        %294 = vmatprep.subr.mxu0 0.0
        %295 = vmatpush1.xpose.msra.mxu0 0.0
        %296 = vmatprep.subr.mxu0 0.0
        %297 = vmatpush1.xpose.msra.mxu0 0.0
        %298 = vmatprep.subr.mxu0 0.0
        %299 = vmatpush1.xpose.msra.mxu0 0.0
        %300 = vmatprep.subr.mxu0 0.0
        %301 = vmatpush1.xpose.msra.mxu0 0.0
        %302 = vmatprep.subr.mxu0 0.0
        %303 = vmatpush1.xpose.msra.mxu0 0.0
        %304 = vmatprep.subr.mxu0 0.0
        %305 = vmatpush1.xpose.msra.mxu0 0.0
        %306 = vmatprep.subr.mxu0 0.0
        %307 = vmatpush1.xpose.msra.mxu0 0.0
        %308 = vmatprep.subr.mxu0 0.0
        %309 = vmatpush1.xpose.msra.mxu0 0.0
        %310 = vmatprep.subr.mxu0 0.0
        %311 = vmatpush1.xpose.msra.mxu0 0.0
        %312 = vmatprep.subr.mxu0 0.0
        %313 = vmatpush1.xpose.msra.mxu0 0.0
        %314 = vmatprep.subr.mxu0 0.0
        %315 = vmatpush1.xpose.msra.mxu0 0.0
        %316 = vmatprep.subr.mxu0 0.0
        %317 = vmatpush1.xpose.msra.mxu0 0.0
        %318 = vmatprep.subr.mxu0 0.0
        %319 = vmatpush1.xpose.msra.mxu0 0.0
        %320 = vmatprep.subr.mxu0 0.0
        %321 = vmatpush1.xpose.msra.mxu0 0.0
        %322 = vmatprep.subr.mxu0 0.0
        %323 = vmatpush1.xpose.msra.mxu0 0.0
        %324 = vmatprep.subr.mxu0 0.0
        %325 = vmatpush1.xpose.msra.mxu0 0.0
        %326 = vmatprep.subr.mxu0 0.0
        %327 = vmatpush1.xpose.msra.mxu0 0.0
        %328 = vmatprep.subr.mxu0 0.0
        %329 = vmatpush1.xpose.msra.mxu0 0.0
        %330 = vmatprep.subr.mxu0 0.0
        %331 = vmatpush1.xpose.msra.mxu0 0.0
        %332 = vmatprep.subr.mxu0 0.0
        %333 = vmatpush1.xpose.msra.mxu0 0.0
        %334 = vmatprep.subr.mxu0 0.0
        %335 = vmatpush1.xpose.msra.mxu0 0.0
        %336 = vmatprep.subr.mxu0 0.0
        %337 = vmatpush1.xpose.msra.mxu0 0.0
        %338 = vmatprep.subr.mxu0 0.0
        %339 = vmatpush1.xpose.msra.mxu0 0.0
        %340 = vmatprep.subr.mxu0 0.0
        %341 = vmatpush1.xpose.msra.mxu0 0.0
        %342 = vmatprep.subr.mxu0 0.0
        %343 = vmatpush1.xpose.msra.mxu0 0.0
        %344 = vmatprep.subr.mxu0 0.0
        %345 = vmatpush1.xpose.msra.mxu0 0.0
        %346 = vmatprep.subr.mxu0 0.0
        %347 = vmatpush1.xpose.msra.mxu0 0.0
        %348 = vmatprep.mubr.f32.mxu0 0.0
        %v349 = vand.u32 %v198, 4294901760
        %350 = vmatmul.mubr.f32.gmra.mrb[0].mxu0 %v349
        %v351 = vpop.f32.mrb[0].mxu0
        %v352 = vadd.f32 %v276, %v351
        %v353 = vpop.f32.mrb[0].mxu0
        %354 = vdwg.mxu0
        %355 = vmatprep.subr.mxu0 0.0
        %v356 = vand.u32 %v201, 4294901760
        %v357 = vsub.f32 %v201, %v356
        %358 = vmatpush1.xpose.msra.mxu0 %v357
        %359 = vmatprep.subr.mxu0 0.0
        %360 = vmatpush1.xpose.msra.mxu0 0.0
        %361 = vmatprep.subr.mxu0 0.0
        %362 = vmatpush1.xpose.msra.mxu0 0.0
        %363 = vmatprep.subr.mxu0 0.0
        %364 = vmatpush1.xpose.msra.mxu0 0.0
        %365 = vmatprep.subr.mxu0 0.0
        %366 = vmatpush1.xpose.msra.mxu0 0.0
        %367 = vmatprep.subr.mxu0 0.0
        %368 = vmatpush1.xpose.msra.mxu0 0.0
        %369 = vmatprep.subr.mxu0 0.0
        %370 = vmatpush1.xpose.msra.mxu0 0.0
        %371 = vmatprep.subr.mxu0 0.0
        %372 = vmatpush1.xpose.msra.mxu0 0.0
        %373 = vmatprep.subr.mxu0 0.0
        %374 = vmatpush1.xpose.msra.mxu0 0.0
        %375 = vmatprep.subr.mxu0 0.0
        %376 = vmatpush1.xpose.msra.mxu0 0.0
        %377 = vmatprep.subr.mxu0 0.0
        %378 = vmatpush1.xpose.msra.mxu0 0.0
        %379 = vmatprep.subr.mxu0 0.0
        %380 = vmatpush1.xpose.msra.mxu0 0.0
        %381 = vmatprep.subr.mxu0 0.0
        %382 = vmatpush1.xpose.msra.mxu0 0.0
        %383 = vmatprep.subr.mxu0 0.0
        %384 = vmatpush1.xpose.msra.mxu0 0.0
        %385 = vmatprep.subr.mxu0 0.0
        %386 = vmatpush1.xpose.msra.mxu0 0.0
        %387 = vmatprep.subr.mxu0 0.0
        %388 = vmatpush1.xpose.msra.mxu0 0.0
        %389 = vmatprep.subr.mxu0 0.0
        %390 = vmatpush1.xpose.msra.mxu0 0.0
        %391 = vmatprep.subr.mxu0 0.0
        %392 = vmatpush1.xpose.msra.mxu0 0.0
        %393 = vmatprep.subr.mxu0 0.0
        %394 = vmatpush1.xpose.msra.mxu0 0.0
        %395 = vmatprep.subr.mxu0 0.0
        %396 = vmatpush1.xpose.msra.mxu0 0.0
        %397 = vmatprep.subr.mxu0 0.0
        %398 = vmatpush1.xpose.msra.mxu0 0.0
        %399 = vmatprep.subr.mxu0 0.0
        %400 = vmatpush1.xpose.msra.mxu0 0.0
        %401 = vmatprep.subr.mxu0 0.0
        %402 = vmatpush1.xpose.msra.mxu0 0.0
        %403 = vmatprep.subr.mxu0 0.0
        %404 = vmatpush1.xpose.msra.mxu0 0.0
        %405 = vmatprep.subr.mxu0 0.0
        %406 = vmatpush1.xpose.msra.mxu0 0.0
        %407 = vmatprep.subr.mxu0 0.0
        %408 = vmatpush1.xpose.msra.mxu0 0.0
        %409 = vmatprep.subr.mxu0 0.0
        %410 = vmatpush1.xpose.msra.mxu0 0.0
        %411 = vmatprep.subr.mxu0 0.0
        %412 = vmatpush1.xpose.msra.mxu0 0.0
        %413 = vmatprep.subr.mxu0 0.0
        %414 = vmatpush1.xpose.msra.mxu0 0.0
        %415 = vmatprep.subr.mxu0 0.0
        %416 = vmatpush1.xpose.msra.mxu0 0.0
        %417 = vmatprep.subr.mxu0 0.0
        %418 = vmatpush1.xpose.msra.mxu0 0.0
        %419 = vmatprep.subr.mxu0 0.0
        %420 = vmatpush1.xpose.msra.mxu0 0.0
        %421 = vmatprep.mubr.f32.mxu0 0.0
        %v422 = vand.u32 %v198, 4294901760
        %v423 = vsub.f32 %v198, %v422
        %424 = vmatmul.mubr.f32.gmra.mrb[0].mxu0 %v423
        %v425 = vpop.f32.mrb[0].mxu0
        %v426 = vadd.f32 %v352, %v425
        %v427 = vpop.f32.mrb[0].mxu0
        %428 = vdwg.mxu0
        %429 = vmatprep.subr.mxu0 0.0
        %v430 = vand.u32 %v201, 4294901760
        %431 = vmatpush1.xpose.msra.mxu0 %v430
        %432 = vmatprep.subr.mxu0 0.0
        %433 = vmatpush1.xpose.msra.mxu0 0.0
        %434 = vmatprep.subr.mxu0 0.0
        %435 = vmatpush1.xpose.msra.mxu0 0.0
        %436 = vmatprep.subr.mxu0 0.0
        %437 = vmatpush1.xpose.msra.mxu0 0.0
        %438 = vmatprep.subr.mxu0 0.0
        %439 = vmatpush1.xpose.msra.mxu0 0.0
        %440 = vmatprep.subr.mxu0 0.0
        %441 = vmatpush1.xpose.msra.mxu0 0.0
        %442 = vmatprep.subr.mxu0 0.0
        %443 = vmatpush1.xpose.msra.mxu0 0.0
        %444 = vmatprep.subr.mxu0 0.0
        %445 = vmatpush1.xpose.msra.mxu0 0.0
        %446 = vmatprep.subr.mxu0 0.0
        %447 = vmatpush1.xpose.msra.mxu0 0.0
        %448 = vmatprep.subr.mxu0 0.0
        %449 = vmatpush1.xpose.msra.mxu0 0.0
        %450 = vmatprep.subr.mxu0 0.0
        %451 = vmatpush1.xpose.msra.mxu0 0.0
        %452 = vmatprep.subr.mxu0 0.0
        %453 = vmatpush1.xpose.msra.mxu0 0.0
        %454 = vmatprep.subr.mxu0 0.0
        %455 = vmatpush1.xpose.msra.mxu0 0.0
        %456 = vmatprep.subr.mxu0 0.0
        %457 = vmatpush1.xpose.msra.mxu0 0.0
        %458 = vmatprep.subr.mxu0 0.0
        %459 = vmatpush1.xpose.msra.mxu0 0.0
        %460 = vmatprep.subr.mxu0 0.0
        %461 = vmatpush1.xpose.msra.mxu0 0.0
        %462 = vmatprep.subr.mxu0 0.0
        %463 = vmatpush1.xpose.msra.mxu0 0.0
        %464 = vmatprep.subr.mxu0 0.0
        %465 = vmatpush1.xpose.msra.mxu0 0.0
        %466 = vmatprep.subr.mxu0 0.0
        %467 = vmatpush1.xpose.msra.mxu0 0.0
        %468 = vmatprep.subr.mxu0 0.0
        %469 = vmatpush1.xpose.msra.mxu0 0.0
        %470 = vmatprep.subr.mxu0 0.0
        %471 = vmatpush1.xpose.msra.mxu0 0.0
        %472 = vmatprep.subr.mxu0 0.0
        %473 = vmatpush1.xpose.msra.mxu0 0.0
        %474 = vmatprep.subr.mxu0 0.0
        %475 = vmatpush1.xpose.msra.mxu0 0.0
        %476 = vmatprep.subr.mxu0 0.0
        %477 = vmatpush1.xpose.msra.mxu0 0.0
        %478 = vmatprep.subr.mxu0 0.0
        %479 = vmatpush1.xpose.msra.mxu0 0.0
        %480 = vmatprep.subr.mxu0 0.0
        %481 = vmatpush1.xpose.msra.mxu0 0.0
        %482 = vmatprep.subr.mxu0 0.0
        %483 = vmatpush1.xpose.msra.mxu0 0.0
        %484 = vmatprep.subr.mxu0 0.0
        %485 = vmatpush1.xpose.msra.mxu0 0.0
        %486 = vmatprep.subr.mxu0 0.0
        %487 = vmatpush1.xpose.msra.mxu0 0.0
        %488 = vmatprep.subr.mxu0 0.0
        %489 = vmatpush1.xpose.msra.mxu0 0.0
        %490 = vmatprep.subr.mxu0 0.0
        %491 = vmatpush1.xpose.msra.mxu0 0.0
        %492 = vmatprep.subr.mxu0 0.0
        %493 = vmatpush1.xpose.msra.mxu0 0.0
        %494 = vmatprep.mubr.f32.mxu0 0.0
        %v495 = vand.u32 %v198, 4294901760
        %v496 = vsub.f32 %v198, %v495
        %v497 = vand.u32 %v496, 4294901760
        %498 = vmatmul.mubr.f32.gmra.mrb[0].mxu0 %v497
        %v499 = vpop.f32.mrb[0].mxu0
        %v500 = vadd.f32 %v426, %v499
        %v501 = vpop.f32.mrb[0].mxu0
        %502 = vdwg.mxu0
        %503 = vmatprep.subr.mxu0 0.0
        %v504 = vand.u32 %v201, 4294901760
        %v505 = vsub.f32 %v201, %v504
        %v506 = vand.u32 %v505, 4294901760
        %507 = vmatpush1.xpose.msra.mxu0 %v506
        %508 = vmatprep.subr.mxu0 0.0
        %509 = vmatpush1.xpose.msra.mxu0 0.0
        %510 = vmatprep.subr.mxu0 0.0
        %511 = vmatpush1.xpose.msra.mxu0 0.0
        %512 = vmatprep.subr.mxu0 0.0
        %513 = vmatpush1.xpose.msra.mxu0 0.0
        %514 = vmatprep.subr.mxu0 0.0
        %515 = vmatpush1.xpose.msra.mxu0 0.0
        %516 = vmatprep.subr.mxu0 0.0
        %517 = vmatpush1.xpose.msra.mxu0 0.0
        %518 = vmatprep.subr.mxu0 0.0
        %519 = vmatpush1.xpose.msra.mxu0 0.0
        %520 = vmatprep.subr.mxu0 0.0
        %521 = vmatpush1.xpose.msra.mxu0 0.0
        %522 = vmatprep.subr.mxu0 0.0
        %523 = vmatpush1.xpose.msra.mxu0 0.0
        %524 = vmatprep.subr.mxu0 0.0
        %525 = vmatpush1.xpose.msra.mxu0 0.0
        %526 = vmatprep.subr.mxu0 0.0
        %527 = vmatpush1.xpose.msra.mxu0 0.0
        %528 = vmatprep.subr.mxu0 0.0
        %529 = vmatpush1.xpose.msra.mxu0 0.0
        %530 = vmatprep.subr.mxu0 0.0
        %531 = vmatpush1.xpose.msra.mxu0 0.0
        %532 = vmatprep.subr.mxu0 0.0
        %533 = vmatpush1.xpose.msra.mxu0 0.0
        %534 = vmatprep.subr.mxu0 0.0
        %535 = vmatpush1.xpose.msra.mxu0 0.0
        %536 = vmatprep.subr.mxu0 0.0
        %537 = vmatpush1.xpose.msra.mxu0 0.0
        %538 = vmatprep.subr.mxu0 0.0
        %539 = vmatpush1.xpose.msra.mxu0 0.0
        %540 = vmatprep.subr.mxu0 0.0
        %541 = vmatpush1.xpose.msra.mxu0 0.0
        %542 = vmatprep.subr.mxu0 0.0
        %543 = vmatpush1.xpose.msra.mxu0 0.0
        %544 = vmatprep.subr.mxu0 0.0
        %545 = vmatpush1.xpose.msra.mxu0 0.0
        %546 = vmatprep.subr.mxu0 0.0
        %547 = vmatpush1.xpose.msra.mxu0 0.0
        %548 = vmatprep.subr.mxu0 0.0
        %549 = vmatpush1.xpose.msra.mxu0 0.0
        %550 = vmatprep.subr.mxu0 0.0
        %551 = vmatpush1.xpose.msra.mxu0 0.0
        %552 = vmatprep.subr.mxu0 0.0
        %553 = vmatpush1.xpose.msra.mxu0 0.0
        %554 = vmatprep.subr.mxu0 0.0
        %555 = vmatpush1.xpose.msra.mxu0 0.0
        %556 = vmatprep.subr.mxu0 0.0
        %557 = vmatpush1.xpose.msra.mxu0 0.0
        %558 = vmatprep.subr.mxu0 0.0
        %559 = vmatpush1.xpose.msra.mxu0 0.0
        %560 = vmatprep.subr.mxu0 0.0
        %561 = vmatpush1.xpose.msra.mxu0 0.0
        %562 = vmatprep.subr.mxu0 0.0
        %563 = vmatpush1.xpose.msra.mxu0 0.0
        %564 = vmatprep.subr.mxu0 0.0
        %565 = vmatpush1.xpose.msra.mxu0 0.0
        %566 = vmatprep.subr.mxu0 0.0
        %567 = vmatpush1.xpose.msra.mxu0 0.0
        %568 = vmatprep.subr.mxu0 0.0
        %569 = vmatpush1.xpose.msra.mxu0 0.0
        %570 = vmatprep.mubr.f32.mxu0 0.0
        %v571 = vand.u32 %v198, 4294901760
        %572 = vmatmul.mubr.f32.gmra.mrb[0].mxu0 %v571
        %v573 = vpop.f32.mrb[0].mxu0
        %v574 = vadd.f32 %v500, %v573
        %v575 = vpop.f32.mrb[0].mxu0
        %576 = vdwg.mxu0
        %577 = vmatprep.subr.mxu0 0.0
        %v578 = vand.u32 %v201, 4294901760
        %579 = vmatpush1.xpose.msra.mxu0 %v578
        %580 = vmatprep.subr.mxu0 0.0
        %581 = vmatpush1.xpose.msra.mxu0 0.0
        %582 = vmatprep.subr.mxu0 0.0
        %583 = vmatpush1.xpose.msra.mxu0 0.0
        %584 = vmatprep.subr.mxu0 0.0
        %585 = vmatpush1.xpose.msra.mxu0 0.0
        %586 = vmatprep.subr.mxu0 0.0
        %587 = vmatpush1.xpose.msra.mxu0 0.0
        %588 = vmatprep.subr.mxu0 0.0
        %589 = vmatpush1.xpose.msra.mxu0 0.0
        %590 = vmatprep.subr.mxu0 0.0
        %591 = vmatpush1.xpose.msra.mxu0 0.0
        %592 = vmatprep.subr.mxu0 0.0
        %593 = vmatpush1.xpose.msra.mxu0 0.0
        %594 = vmatprep.subr.mxu0 0.0
        %595 = vmatpush1.xpose.msra.mxu0 0.0
        %596 = vmatprep.subr.mxu0 0.0
        %597 = vmatpush1.xpose.msra.mxu0 0.0
        %598 = vmatprep.subr.mxu0 0.0
        %599 = vmatpush1.xpose.msra.mxu0 0.0
        %600 = vmatprep.subr.mxu0 0.0
        %601 = vmatpush1.xpose.msra.mxu0 0.0
        %602 = vmatprep.subr.mxu0 0.0
        %603 = vmatpush1.xpose.msra.mxu0 0.0
        %604 = vmatprep.subr.mxu0 0.0
        %605 = vmatpush1.xpose.msra.mxu0 0.0
        %606 = vmatprep.subr.mxu0 0.0
        %607 = vmatpush1.xpose.msra.mxu0 0.0
        %608 = vmatprep.subr.mxu0 0.0
        %609 = vmatpush1.xpose.msra.mxu0 0.0
        %610 = vmatprep.subr.mxu0 0.0
        %611 = vmatpush1.xpose.msra.mxu0 0.0
        %612 = vmatprep.subr.mxu0 0.0
        %613 = vmatpush1.xpose.msra.mxu0 0.0
        %614 = vmatprep.subr.mxu0 0.0
        %615 = vmatpush1.xpose.msra.mxu0 0.0
        %616 = vmatprep.subr.mxu0 0.0
        %617 = vmatpush1.xpose.msra.mxu0 0.0
        %618 = vmatprep.subr.mxu0 0.0
        %619 = vmatpush1.xpose.msra.mxu0 0.0
        %620 = vmatprep.subr.mxu0 0.0
        %621 = vmatpush1.xpose.msra.mxu0 0.0
        %622 = vmatprep.subr.mxu0 0.0
        %623 = vmatpush1.xpose.msra.mxu0 0.0
        %624 = vmatprep.subr.mxu0 0.0
        %625 = vmatpush1.xpose.msra.mxu0 0.0
        %626 = vmatprep.subr.mxu0 0.0
        %627 = vmatpush1.xpose.msra.mxu0 0.0
        %628 = vmatprep.subr.mxu0 0.0
        %629 = vmatpush1.xpose.msra.mxu0 0.0
        %630 = vmatprep.subr.mxu0 0.0
        %631 = vmatpush1.xpose.msra.mxu0 0.0
        %632 = vmatprep.subr.mxu0 0.0
        %633 = vmatpush1.xpose.msra.mxu0 0.0
        %634 = vmatprep.subr.mxu0 0.0
        %635 = vmatpush1.xpose.msra.mxu0 0.0
        %636 = vmatprep.subr.mxu0 0.0
        %637 = vmatpush1.xpose.msra.mxu0 0.0
        %638 = vmatprep.subr.mxu0 0.0
        %639 = vmatpush1.xpose.msra.mxu0 0.0
        %640 = vmatprep.subr.mxu0 0.0
        %641 = vmatpush1.xpose.msra.mxu0 0.0
        %642 = vmatprep.mubr.f32.mxu0 0.0
        %v643 = vand.u32 %v198, 4294901760
        %644 = vmatmul.mubr.f32.gmra.mrb[0].mxu0 %v643
        %v645 = vpop.f32.mrb[0].mxu0
        %v646 = vadd.f32 %v574, %v645
        %v647 = vpop.f32.mrb[0].mxu0
        %648 = vdwg.mxu0
        %v649 = vlaneseq
        %v650 = vshrl.u32 %v649, 7
        %v651 = vlaneseq
        %v652 = vand.u32 %v651, 127
        %vm653 = vcmp.eq.s32.totalorder %v650, %v652
        %v654 = vmul.f32 %v194, %v195
        %v655 = vsel %vm196, %v654, 0.0
        %656 = vadd.xlane.f32.xlu0 %v655
        %v657 = vpop.xlane.xlu0 %656
        %658 = vmatprep.subr.mxu0 0.0
        %v659 = vand.u32 %v198, 4294901760
        %660 = vmatpush1.xpose.msra.mxu0 %v659
        %661 = vmatprep.subr.mxu0 0.0
        %662 = vmatpush1.xpose.msra.mxu0 0.0
        %663 = vmatprep.subr.mxu0 0.0
        %664 = vmatpush1.xpose.msra.mxu0 0.0
        %665 = vmatprep.subr.mxu0 0.0
        %666 = vmatpush1.xpose.msra.mxu0 0.0
        %667 = vmatprep.subr.mxu0 0.0
        %668 = vmatpush1.xpose.msra.mxu0 0.0
        %669 = vmatprep.subr.mxu0 0.0
        %670 = vmatpush1.xpose.msra.mxu0 0.0
        %671 = vmatprep.subr.mxu0 0.0
        %672 = vmatpush1.xpose.msra.mxu0 0.0
        %673 = vmatprep.subr.mxu0 0.0
        %674 = vmatpush1.xpose.msra.mxu0 0.0
        %675 = vmatprep.subr.mxu0 0.0
        %676 = vmatpush1.xpose.msra.mxu0 0.0
        %677 = vmatprep.subr.mxu0 0.0
        %678 = vmatpush1.xpose.msra.mxu0 0.0
        %679 = vmatprep.subr.mxu0 0.0
        %680 = vmatpush1.xpose.msra.mxu0 0.0
        %681 = vmatprep.subr.mxu0 0.0
        %682 = vmatpush1.xpose.msra.mxu0 0.0
        %683 = vmatprep.subr.mxu0 0.0
        %684 = vmatpush1.xpose.msra.mxu0 0.0
        %685 = vmatprep.subr.mxu0 0.0
        %686 = vmatpush1.xpose.msra.mxu0 0.0
        %687 = vmatprep.subr.mxu0 0.0
        %688 = vmatpush1.xpose.msra.mxu0 0.0
        %689 = vmatprep.subr.mxu0 0.0
        %690 = vmatpush1.xpose.msra.mxu0 0.0
        %691 = vmatprep.subr.mxu0 0.0
        %692 = vmatpush1.xpose.msra.mxu0 0.0
        %693 = vmatprep.subr.mxu0 0.0
        %694 = vmatpush1.xpose.msra.mxu0 0.0
        %695 = vmatprep.subr.mxu0 0.0
        %696 = vmatpush1.xpose.msra.mxu0 0.0
        %697 = vmatprep.subr.mxu0 0.0
        %698 = vmatpush1.xpose.msra.mxu0 0.0
        %699 = vmatprep.subr.mxu0 0.0
        %700 = vmatpush1.xpose.msra.mxu0 0.0
        %701 = vmatprep.subr.mxu0 0.0
        %702 = vmatpush1.xpose.msra.mxu0 0.0
        %703 = vmatprep.subr.mxu0 0.0
        %704 = vmatpush1.xpose.msra.mxu0 0.0
        %705 = vmatprep.subr.mxu0 0.0
        %706 = vmatpush1.xpose.msra.mxu0 0.0
        %707 = vmatprep.subr.mxu0 0.0
        %708 = vmatpush1.xpose.msra.mxu0 0.0
        %709 = vmatprep.subr.mxu0 0.0
        %710 = vmatpush1.xpose.msra.mxu0 0.0
        %711 = vmatprep.subr.mxu0 0.0
        %712 = vmatpush1.xpose.msra.mxu0 0.0
        %713 = vmatprep.subr.mxu0 0.0
        %714 = vmatpush1.xpose.msra.mxu0 0.0
        %715 = vmatprep.subr.mxu0 0.0
        %716 = vmatpush1.xpose.msra.mxu0 0.0
        %717 = vmatprep.subr.mxu0 0.0
        %718 = vmatpush1.xpose.msra.mxu0 0.0
        %719 = vmatprep.subr.mxu0 0.0
        %720 = vmatpush1.xpose.msra.mxu0 0.0
        %721 = vmatprep.subr.mxu0 0.0
        %722 = vmatpush1.xpose.msra.mxu0 0.0
        %723 = vmatprep.mubr.f32.mxu0 0.0
        %v724 = vand.u32 %v198, 4294901760
        %v725 = vsub.f32 %v198, %v724
        %v726 = vand.u32 %v725, 4294901760
        %v727 = vsub.f32 %v725, %v726
        %v728 = vand.u32 %v727, 4294901760
        %729 = vmatmul.mubr.f32.gmra.mrb[0].mxu0 %v728
        %v730 = vpop.f32.mrb[0].mxu0
        %v731 = vadd.f32 0.0, %v730
        %v732 = vpop.f32.mrb[0].mxu0
        %733 = vdwg.mxu0
        %734 = vmatprep.subr.mxu0 0.0
        %v735 = vand.u32 %v198, 4294901760
        %v736 = vsub.f32 %v198, %v735
        %v737 = vand.u32 %v736, 4294901760
        %v738 = vsub.f32 %v736, %v737
        %v739 = vand.u32 %v738, 4294901760
        %740 = vmatpush1.xpose.msra.mxu0 %v739
        %741 = vmatprep.subr.mxu0 0.0
        %742 = vmatpush1.xpose.msra.mxu0 0.0
        %743 = vmatprep.subr.mxu0 0.0
        %744 = vmatpush1.xpose.msra.mxu0 0.0
        %745 = vmatprep.subr.mxu0 0.0
        %746 = vmatpush1.xpose.msra.mxu0 0.0
        %747 = vmatprep.subr.mxu0 0.0
        %748 = vmatpush1.xpose.msra.mxu0 0.0
        %749 = vmatprep.subr.mxu0 0.0
        %750 = vmatpush1.xpose.msra.mxu0 0.0
        %751 = vmatprep.subr.mxu0 0.0
        %752 = vmatpush1.xpose.msra.mxu0 0.0
        %753 = vmatprep.subr.mxu0 0.0
        %754 = vmatpush1.xpose.msra.mxu0 0.0
        %755 = vmatprep.subr.mxu0 0.0
        %756 = vmatpush1.xpose.msra.mxu0 0.0
        %757 = vmatprep.subr.mxu0 0.0
        %758 = vmatpush1.xpose.msra.mxu0 0.0
        %759 = vmatprep.subr.mxu0 0.0
        %760 = vmatpush1.xpose.msra.mxu0 0.0
        %761 = vmatprep.subr.mxu0 0.0
        %762 = vmatpush1.xpose.msra.mxu0 0.0
        %763 = vmatprep.subr.mxu0 0.0
        %764 = vmatpush1.xpose.msra.mxu0 0.0
        %765 = vmatprep.subr.mxu0 0.0
        %766 = vmatpush1.xpose.msra.mxu0 0.0
        %767 = vmatprep.subr.mxu0 0.0
        %768 = vmatpush1.xpose.msra.mxu0 0.0
        %769 = vmatprep.subr.mxu0 0.0
        %770 = vmatpush1.xpose.msra.mxu0 0.0
        %771 = vmatprep.subr.mxu0 0.0
        %772 = vmatpush1.xpose.msra.mxu0 0.0
        %773 = vmatprep.subr.mxu0 0.0
        %774 = vmatpush1.xpose.msra.mxu0 0.0
        %775 = vmatprep.subr.mxu0 0.0
        %776 = vmatpush1.xpose.msra.mxu0 0.0
        %777 = vmatprep.subr.mxu0 0.0
        %778 = vmatpush1.xpose.msra.mxu0 0.0
        %779 = vmatprep.subr.mxu0 0.0
        %780 = vmatpush1.xpose.msra.mxu0 0.0
        %781 = vmatprep.subr.mxu0 0.0
        %782 = vmatpush1.xpose.msra.mxu0 0.0
        %783 = vmatprep.subr.mxu0 0.0
        %784 = vmatpush1.xpose.msra.mxu0 0.0
        %785 = vmatprep.subr.mxu0 0.0
        %786 = vmatpush1.xpose.msra.mxu0 0.0
        %787 = vmatprep.subr.mxu0 0.0
        %788 = vmatpush1.xpose.msra.mxu0 0.0
        %789 = vmatprep.subr.mxu0 0.0
        %790 = vmatpush1.xpose.msra.mxu0 0.0
        %791 = vmatprep.subr.mxu0 0.0
        %792 = vmatpush1.xpose.msra.mxu0 0.0
        %793 = vmatprep.subr.mxu0 0.0
        %794 = vmatpush1.xpose.msra.mxu0 0.0
        %795 = vmatprep.subr.mxu0 0.0
        %796 = vmatpush1.xpose.msra.mxu0 0.0
        %797 = vmatprep.subr.mxu0 0.0
        %798 = vmatpush1.xpose.msra.mxu0 0.0
        %799 = vmatprep.subr.mxu0 0.0
        %800 = vmatpush1.xpose.msra.mxu0 0.0
        %801 = vmatprep.subr.mxu0 0.0
        %802 = vmatpush1.xpose.msra.mxu0 0.0
        %803 = vmatprep.mubr.f32.mxu0 0.0
        %v804 = vand.u32 %v198, 4294901760
        %805 = vmatmul.mubr.f32.gmra.mrb[0].mxu0 %v804
        %v806 = vpop.f32.mrb[0].mxu0
        %v807 = vadd.f32 %v731, %v806
        %v808 = vpop.f32.mrb[0].mxu0
        %809 = vdwg.mxu0
        %810 = vmatprep.subr.mxu0 0.0
        %v811 = vand.u32 %v198, 4294901760
        %v812 = vsub.f32 %v198, %v811
        %813 = vmatpush1.xpose.msra.mxu0 %v812
        %814 = vmatprep.subr.mxu0 0.0
        %815 = vmatpush1.xpose.msra.mxu0 0.0
        %816 = vmatprep.subr.mxu0 0.0
        %817 = vmatpush1.xpose.msra.mxu0 0.0
        %818 = vmatprep.subr.mxu0 0.0
        %819 = vmatpush1.xpose.msra.mxu0 0.0
        %820 = vmatprep.subr.mxu0 0.0
        %821 = vmatpush1.xpose.msra.mxu0 0.0
        %822 = vmatprep.subr.mxu0 0.0
        %823 = vmatpush1.xpose.msra.mxu0 0.0
        %824 = vmatprep.subr.mxu0 0.0
        %825 = vmatpush1.xpose.msra.mxu0 0.0
        %826 = vmatprep.subr.mxu0 0.0
        %827 = vmatpush1.xpose.msra.mxu0 0.0
        %828 = vmatprep.subr.mxu0 0.0
        %829 = vmatpush1.xpose.msra.mxu0 0.0
        %830 = vmatprep.subr.mxu0 0.0
        %831 = vmatpush1.xpose.msra.mxu0 0.0
        %832 = vmatprep.subr.mxu0 0.0
        %833 = vmatpush1.xpose.msra.mxu0 0.0
        %834 = vmatprep.subr.mxu0 0.0
        %835 = vmatpush1.xpose.msra.mxu0 0.0
        %836 = vmatprep.subr.mxu0 0.0
        %837 = vmatpush1.xpose.msra.mxu0 0.0
        %838 = vmatprep.subr.mxu0 0.0
        %839 = vmatpush1.xpose.msra.mxu0 0.0
        %840 = vmatprep.subr.mxu0 0.0
        %841 = vmatpush1.xpose.msra.mxu0 0.0
        %842 = vmatprep.subr.mxu0 0.0
        %843 = vmatpush1.xpose.msra.mxu0 0.0
        %844 = vmatprep.subr.mxu0 0.0
        %845 = vmatpush1.xpose.msra.mxu0 0.0
        %846 = vmatprep.subr.mxu0 0.0
        %847 = vmatpush1.xpose.msra.mxu0 0.0
        %848 = vmatprep.subr.mxu0 0.0
        %849 = vmatpush1.xpose.msra.mxu0 0.0
        %850 = vmatprep.subr.mxu0 0.0
        %851 = vmatpush1.xpose.msra.mxu0 0.0
        %852 = vmatprep.subr.mxu0 0.0
        %853 = vmatpush1.xpose.msra.mxu0 0.0
        %854 = vmatprep.subr.mxu0 0.0
        %855 = vmatpush1.xpose.msra.mxu0 0.0
        %856 = vmatprep.subr.mxu0 0.0
        %857 = vmatpush1.xpose.msra.mxu0 0.0
        %858 = vmatprep.subr.mxu0 0.0
        %859 = vmatpush1.xpose.msra.mxu0 0.0
        %860 = vmatprep.subr.mxu0 0.0
        %861 = vmatpush1.xpose.msra.mxu0 0.0
        %862 = vmatprep.subr.mxu0 0.0
        %863 = vmatpush1.xpose.msra.mxu0 0.0
        %864 = vmatprep.subr.mxu0 0.0
        %865 = vmatpush1.xpose.msra.mxu0 0.0
        %866 = vmatprep.subr.mxu0 0.0
        %867 = vmatpush1.xpose.msra.mxu0 0.0
        %868 = vmatprep.subr.mxu0 0.0
        %869 = vmatpush1.xpose.msra.mxu0 0.0
        %870 = vmatprep.subr.mxu0 0.0
        %871 = vmatpush1.xpose.msra.mxu0 0.0
        %872 = vmatprep.subr.mxu0 0.0
        %873 = vmatpush1.xpose.msra.mxu0 0.0
        %874 = vmatprep.subr.mxu0 0.0
        %875 = vmatpush1.xpose.msra.mxu0 0.0
        %876 = vmatprep.mubr.f32.mxu0 0.0
        %v877 = vand.u32 %v198, 4294901760
        %v878 = vsub.f32 %v198, %v877
        %879 = vmatmul.mubr.f32.gmra.mrb[0].mxu0 %v878
        %v880 = vpop.f32.mrb[0].mxu0
        %v881 = vadd.f32 %v807, %v880
        %v882 = vpop.f32.mrb[0].mxu0
        %883 = vdwg.mxu0
        %884 = vmatprep.subr.mxu0 0.0
        %v885 = vand.u32 %v198, 4294901760
        %886 = vmatpush1.xpose.msra.mxu0 %v885
        %887 = vmatprep.subr.mxu0 0.0
        %888 = vmatpush1.xpose.msra.mxu0 0.0
        %889 = vmatprep.subr.mxu0 0.0
        %890 = vmatpush1.xpose.msra.mxu0 0.0
        %891 = vmatprep.subr.mxu0 0.0
        %892 = vmatpush1.xpose.msra.mxu0 0.0
        %893 = vmatprep.subr.mxu0 0.0
        %894 = vmatpush1.xpose.msra.mxu0 0.0
        %895 = vmatprep.subr.mxu0 0.0
        %896 = vmatpush1.xpose.msra.mxu0 0.0
        %897 = vmatprep.subr.mxu0 0.0
        %898 = vmatpush1.xpose.msra.mxu0 0.0
        %899 = vmatprep.subr.mxu0 0.0
        %900 = vmatpush1.xpose.msra.mxu0 0.0
        %901 = vmatprep.subr.mxu0 0.0
        %902 = vmatpush1.xpose.msra.mxu0 0.0
        %903 = vmatprep.subr.mxu0 0.0
        %904 = vmatpush1.xpose.msra.mxu0 0.0
        %905 = vmatprep.subr.mxu0 0.0
        %906 = vmatpush1.xpose.msra.mxu0 0.0
        %907 = vmatprep.subr.mxu0 0.0
        %908 = vmatpush1.xpose.msra.mxu0 0.0
        %909 = vmatprep.subr.mxu0 0.0
        %910 = vmatpush1.xpose.msra.mxu0 0.0
        %911 = vmatprep.subr.mxu0 0.0
        %912 = vmatpush1.xpose.msra.mxu0 0.0
        %913 = vmatprep.subr.mxu0 0.0
        %914 = vmatpush1.xpose.msra.mxu0 0.0
        %915 = vmatprep.subr.mxu0 0.0
        %916 = vmatpush1.xpose.msra.mxu0 0.0
        %917 = vmatprep.subr.mxu0 0.0
        %918 = vmatpush1.xpose.msra.mxu0 0.0
        %919 = vmatprep.subr.mxu0 0.0
        %920 = vmatpush1.xpose.msra.mxu0 0.0
        %921 = vmatprep.subr.mxu0 0.0
        %922 = vmatpush1.xpose.msra.mxu0 0.0
        %923 = vmatprep.subr.mxu0 0.0
        %924 = vmatpush1.xpose.msra.mxu0 0.0
        %925 = vmatprep.subr.mxu0 0.0
        %926 = vmatpush1.xpose.msra.mxu0 0.0
        %927 = vmatprep.subr.mxu0 0.0
        %928 = vmatpush1.xpose.msra.mxu0 0.0
        %929 = vmatprep.subr.mxu0 0.0
        %930 = vmatpush1.xpose.msra.mxu0 0.0
        %931 = vmatprep.subr.mxu0 0.0
        %932 = vmatpush1.xpose.msra.mxu0 0.0
        %933 = vmatprep.subr.mxu0 0.0
        %934 = vmatpush1.xpose.msra.mxu0 0.0
        %935 = vmatprep.subr.mxu0 0.0
        %936 = vmatpush1.xpose.msra.mxu0 0.0
        %937 = vmatprep.subr.mxu0 0.0
        %938 = vmatpush1.xpose.msra.mxu0 0.0
        %939 = vmatprep.subr.mxu0 0.0
        %940 = vmatpush1.xpose.msra.mxu0 0.0
        %941 = vmatprep.subr.mxu0 0.0
        %942 = vmatpush1.xpose.msra.mxu0 0.0
        %943 = vmatprep.subr.mxu0 0.0
        %944 = vmatpush1.xpose.msra.mxu0 0.0
        %945 = vmatprep.subr.mxu0 0.0
        %946 = vmatpush1.xpose.msra.mxu0 0.0
        %947 = vmatprep.subr.mxu0 0.0
        %948 = vmatpush1.xpose.msra.mxu0 0.0
        %949 = vmatprep.mubr.f32.mxu0 0.0
        %v950 = vand.u32 %v198, 4294901760
        %v951 = vsub.f32 %v198, %v950
        %v952 = vand.u32 %v951, 4294901760
        %953 = vmatmul.mubr.f32.gmra.mrb[0].mxu0 %v952
        %v954 = vpop.f32.mrb[0].mxu0
        %v955 = vadd.f32 %v881, %v954
        %v956 = vpop.f32.mrb[0].mxu0
        %957 = vdwg.mxu0
        %958 = vmatprep.subr.mxu0 0.0
        %v959 = vand.u32 %v198, 4294901760
        %v960 = vsub.f32 %v198, %v959
        %v961 = vand.u32 %v960, 4294901760
        %962 = vmatpush1.xpose.msra.mxu0 %v961
        %963 = vmatprep.subr.mxu0 0.0
        %964 = vmatpush1.xpose.msra.mxu0 0.0
        %965 = vmatprep.subr.mxu0 0.0
        %966 = vmatpush1.xpose.msra.mxu0 0.0
        %967 = vmatprep.subr.mxu0 0.0
        %968 = vmatpush1.xpose.msra.mxu0 0.0
        %969 = vmatprep.subr.mxu0 0.0
        %970 = vmatpush1.xpose.msra.mxu0 0.0
        %971 = vmatprep.subr.mxu0 0.0
        %972 = vmatpush1.xpose.msra.mxu0 0.0
        %973 = vmatprep.subr.mxu0 0.0
        %974 = vmatpush1.xpose.msra.mxu0 0.0
        %975 = vmatprep.subr.mxu0 0.0
        %976 = vmatpush1.xpose.msra.mxu0 0.0
        %977 = vmatprep.subr.mxu0 0.0
        %978 = vmatpush1.xpose.msra.mxu0 0.0
        %979 = vmatprep.subr.mxu0 0.0
        %980 = vmatpush1.xpose.msra.mxu0 0.0
        %981 = vmatprep.subr.mxu0 0.0
        %982 = vmatpush1.xpose.msra.mxu0 0.0
        %983 = vmatprep.subr.mxu0 0.0
        %984 = vmatpush1.xpose.msra.mxu0 0.0
        %985 = vmatprep.subr.mxu0 0.0
        %986 = vmatpush1.xpose.msra.mxu0 0.0
        %987 = vmatprep.subr.mxu0 0.0
        %988 = vmatpush1.xpose.msra.mxu0 0.0
        %989 = vmatprep.subr.mxu0 0.0
        %990 = vmatpush1.xpose.msra.mxu0 0.0
        %991 = vmatprep.subr.mxu0 0.0
        %992 = vmatpush1.xpose.msra.mxu0 0.0
        %993 = vmatprep.subr.mxu0 0.0
        %994 = vmatpush1.xpose.msra.mxu0 0.0
        %995 = vmatprep.subr.mxu0 0.0
        %996 = vmatpush1.xpose.msra.mxu0 0.0
        %997 = vmatprep.subr.mxu0 0.0
        %998 = vmatpush1.xpose.msra.mxu0 0.0
        %999 = vmatprep.subr.mxu0 0.0
        %1000 = vmatpush1.xpose.msra.mxu0 0.0
        %1001 = vmatprep.subr.mxu0 0.0
        %1002 = vmatpush1.xpose.msra.mxu0 0.0
        %1003 = vmatprep.subr.mxu0 0.0
        %1004 = vmatpush1.xpose.msra.mxu0 0.0
        %1005 = vmatprep.subr.mxu0 0.0
        %1006 = vmatpush1.xpose.msra.mxu0 0.0
        %1007 = vmatprep.subr.mxu0 0.0
        %1008 = vmatpush1.xpose.msra.mxu0 0.0
        %1009 = vmatprep.subr.mxu0 0.0
        %1010 = vmatpush1.xpose.msra.mxu0 0.0
        %1011 = vmatprep.subr.mxu0 0.0
        %1012 = vmatpush1.xpose.msra.mxu0 0.0
        %1013 = vmatprep.subr.mxu0 0.0
        %1014 = vmatpush1.xpose.msra.mxu0 0.0
        %1015 = vmatprep.subr.mxu0 0.0
        %1016 = vmatpush1.xpose.msra.mxu0 0.0
        %1017 = vmatprep.subr.mxu0 0.0
        %1018 = vmatpush1.xpose.msra.mxu0 0.0
        %1019 = vmatprep.subr.mxu0 0.0
        %1020 = vmatpush1.xpose.msra.mxu0 0.0
        %1021 = vmatprep.subr.mxu0 0.0
        %1022 = vmatpush1.xpose.msra.mxu0 0.0
        %1023 = vmatprep.subr.mxu0 0.0
        %1024 = vmatpush1.xpose.msra.mxu0 0.0
        %1025 = vmatprep.mubr.f32.mxu0 0.0
        %v1026 = vand.u32 %v198, 4294901760
        %1027 = vmatmul.mubr.f32.gmra.mrb[0].mxu0 %v1026
        %v1028 = vpop.f32.mrb[0].mxu0
        %v1029 = vadd.f32 %v955, %v1028
        %v1030 = vpop.f32.mrb[0].mxu0
        %1031 = vdwg.mxu0
        %1032 = vmatprep.subr.mxu0 0.0
        %v1033 = vand.u32 %v198, 4294901760
        %1034 = vmatpush1.xpose.msra.mxu0 %v1033
        %1035 = vmatprep.subr.mxu0 0.0
        %1036 = vmatpush1.xpose.msra.mxu0 0.0
        %1037 = vmatprep.subr.mxu0 0.0
        %1038 = vmatpush1.xpose.msra.mxu0 0.0
        %1039 = vmatprep.subr.mxu0 0.0
        %1040 = vmatpush1.xpose.msra.mxu0 0.0
        %1041 = vmatprep.subr.mxu0 0.0
        %1042 = vmatpush1.xpose.msra.mxu0 0.0
        %1043 = vmatprep.subr.mxu0 0.0
        %1044 = vmatpush1.xpose.msra.mxu0 0.0
        %1045 = vmatprep.subr.mxu0 0.0
        %1046 = vmatpush1.xpose.msra.mxu0 0.0
        %1047 = vmatprep.subr.mxu0 0.0
        %1048 = vmatpush1.xpose.msra.mxu0 0.0
        %1049 = vmatprep.subr.mxu0 0.0
        %1050 = vmatpush1.xpose.msra.mxu0 0.0
        %1051 = vmatprep.subr.mxu0 0.0
        %1052 = vmatpush1.xpose.msra.mxu0 0.0
        %1053 = vmatprep.subr.mxu0 0.0
        %1054 = vmatpush1.xpose.msra.mxu0 0.0
        %1055 = vmatprep.subr.mxu0 0.0
        %1056 = vmatpush1.xpose.msra.mxu0 0.0
        %1057 = vmatprep.subr.mxu0 0.0
        %1058 = vmatpush1.xpose.msra.mxu0 0.0
        %1059 = vmatprep.subr.mxu0 0.0
        %1060 = vmatpush1.xpose.msra.mxu0 0.0
        %1061 = vmatprep.subr.mxu0 0.0
        %1062 = vmatpush1.xpose.msra.mxu0 0.0
        %1063 = vmatprep.subr.mxu0 0.0
        %1064 = vmatpush1.xpose.msra.mxu0 0.0
        %1065 = vmatprep.subr.mxu0 0.0
        %1066 = vmatpush1.xpose.msra.mxu0 0.0
        %1067 = vmatprep.subr.mxu0 0.0
        %1068 = vmatpush1.xpose.msra.mxu0 0.0
        %1069 = vmatprep.subr.mxu0 0.0
        %1070 = vmatpush1.xpose.msra.mxu0 0.0
        %1071 = vmatprep.subr.mxu0 0.0
        %1072 = vmatpush1.xpose.msra.mxu0 0.0
        %1073 = vmatprep.subr.mxu0 0.0
        %1074 = vmatpush1.xpose.msra.mxu0 0.0
        %1075 = vmatprep.subr.mxu0 0.0
        %1076 = vmatpush1.xpose.msra.mxu0 0.0
        %1077 = vmatprep.subr.mxu0 0.0
        %1078 = vmatpush1.xpose.msra.mxu0 0.0
        %1079 = vmatprep.subr.mxu0 0.0
        %1080 = vmatpush1.xpose.msra.mxu0 0.0
        %1081 = vmatprep.subr.mxu0 0.0
        %1082 = vmatpush1.xpose.msra.mxu0 0.0
        %1083 = vmatprep.subr.mxu0 0.0
        %1084 = vmatpush1.xpose.msra.mxu0 0.0
        %1085 = vmatprep.subr.mxu0 0.0
        %1086 = vmatpush1.xpose.msra.mxu0 0.0
        %1087 = vmatprep.subr.mxu0 0.0
        %1088 = vmatpush1.xpose.msra.mxu0 0.0
        %1089 = vmatprep.subr.mxu0 0.0
        %1090 = vmatpush1.xpose.msra.mxu0 0.0
        %1091 = vmatprep.subr.mxu0 0.0
        %1092 = vmatpush1.xpose.msra.mxu0 0.0
        %1093 = vmatprep.subr.mxu0 0.0
        %1094 = vmatpush1.xpose.msra.mxu0 0.0
        %1095 = vmatprep.subr.mxu0 0.0
        %1096 = vmatpush1.xpose.msra.mxu0 0.0
        %1097 = vmatprep.mubr.f32.mxu0 0.0
        %v1098 = vand.u32 %v198, 4294901760
        %1099 = vmatmul.mubr.f32.gmra.mrb[0].mxu0 %v1098
        %v1100 = vpop.f32.mrb[0].mxu0
        %v1101 = vadd.f32 %v1029, %v1100
        %v1102 = vpop.f32.mrb[0].mxu0
        %1103 = vdwg.mxu0
        %1104 = vmatprep.subr.mxu0 0.0
        %v1105 = vand.u32 %v201, 4294901760
        %1106 = vmatpush1.xpose.msra.mxu0 %v1105
        %1107 = vmatprep.subr.mxu0 0.0
        %1108 = vmatpush1.xpose.msra.mxu0 0.0
        %1109 = vmatprep.subr.mxu0 0.0
        %1110 = vmatpush1.xpose.msra.mxu0 0.0
        %1111 = vmatprep.subr.mxu0 0.0
        %1112 = vmatpush1.xpose.msra.mxu0 0.0
        %1113 = vmatprep.subr.mxu0 0.0
        %1114 = vmatpush1.xpose.msra.mxu0 0.0
        %1115 = vmatprep.subr.mxu0 0.0
        %1116 = vmatpush1.xpose.msra.mxu0 0.0
        %1117 = vmatprep.subr.mxu0 0.0
        %1118 = vmatpush1.xpose.msra.mxu0 0.0
        %1119 = vmatprep.subr.mxu0 0.0
        %1120 = vmatpush1.xpose.msra.mxu0 0.0
        %1121 = vmatprep.subr.mxu0 0.0
        %1122 = vmatpush1.xpose.msra.mxu0 0.0
        %1123 = vmatprep.subr.mxu0 0.0
        %1124 = vmatpush1.xpose.msra.mxu0 0.0
        %1125 = vmatprep.subr.mxu0 0.0
        %1126 = vmatpush1.xpose.msra.mxu0 0.0
        %1127 = vmatprep.subr.mxu0 0.0
        %1128 = vmatpush1.xpose.msra.mxu0 0.0
        %1129 = vmatprep.subr.mxu0 0.0
        %1130 = vmatpush1.xpose.msra.mxu0 0.0
        %1131 = vmatprep.subr.mxu0 0.0
        %1132 = vmatpush1.xpose.msra.mxu0 0.0
        %1133 = vmatprep.subr.mxu0 0.0
        %1134 = vmatpush1.xpose.msra.mxu0 0.0
        %1135 = vmatprep.subr.mxu0 0.0
        %1136 = vmatpush1.xpose.msra.mxu0 0.0
        %1137 = vmatprep.subr.mxu0 0.0
        %1138 = vmatpush1.xpose.msra.mxu0 0.0
        %1139 = vmatprep.subr.mxu0 0.0
        %1140 = vmatpush1.xpose.msra.mxu0 0.0
        %1141 = vmatprep.subr.mxu0 0.0
        %1142 = vmatpush1.xpose.msra.mxu0 0.0
        %1143 = vmatprep.subr.mxu0 0.0
        %1144 = vmatpush1.xpose.msra.mxu0 0.0
        %1145 = vmatprep.subr.mxu0 0.0
        %1146 = vmatpush1.xpose.msra.mxu0 0.0
        %1147 = vmatprep.subr.mxu0 0.0
        %1148 = vmatpush1.xpose.msra.mxu0 0.0
        %1149 = vmatprep.subr.mxu0 0.0
        %1150 = vmatpush1.xpose.msra.mxu0 0.0
        %1151 = vmatprep.subr.mxu0 0.0
        %1152 = vmatpush1.xpose.msra.mxu0 0.0
        %1153 = vmatprep.subr.mxu0 0.0
        %1154 = vmatpush1.xpose.msra.mxu0 0.0
        %1155 = vmatprep.subr.mxu0 0.0
        %1156 = vmatpush1.xpose.msra.mxu0 0.0
        %1157 = vmatprep.subr.mxu0 0.0
        %1158 = vmatpush1.xpose.msra.mxu0 0.0
        %1159 = vmatprep.subr.mxu0 0.0
        %1160 = vmatpush1.xpose.msra.mxu0 0.0
        %1161 = vmatprep.subr.mxu0 0.0
        %1162 = vmatpush1.xpose.msra.mxu0 0.0
        %1163 = vmatprep.subr.mxu0 0.0
        %1164 = vmatpush1.xpose.msra.mxu0 0.0
        %1165 = vmatprep.subr.mxu0 0.0
        %1166 = vmatpush1.xpose.msra.mxu0 0.0
        %1167 = vmatprep.subr.mxu0 0.0
        %1168 = vmatpush1.xpose.msra.mxu0 0.0
        %1169 = vmatprep.mubr.f32.mxu0 0.0
        %v1170 = vand.u32 %v201, 4294901760
        %v1171 = vsub.f32 %v201, %v1170
        %v1172 = vand.u32 %v1171, 4294901760
        %v1173 = vsub.f32 %v1171, %v1172
        %v1174 = vand.u32 %v1173, 4294901760
        %1175 = vmatmul.mubr.f32.gmra.mrb[0].mxu0 %v1174
        %v1176 = vpop.f32.mrb[0].mxu0
        %v1177 = vadd.f32 0.0, %v1176
        %v1178 = vpop.f32.mrb[0].mxu0
        %1179 = vdwg.mxu0
        %1180 = vmatprep.subr.mxu0 0.0
        %v1181 = vand.u32 %v201, 4294901760
        %v1182 = vsub.f32 %v201, %v1181
        %v1183 = vand.u32 %v1182, 4294901760
        %v1184 = vsub.f32 %v1182, %v1183
        %v1185 = vand.u32 %v1184, 4294901760
        %1186 = vmatpush1.xpose.msra.mxu0 %v1185
        %1187 = vmatprep.subr.mxu0 0.0
        %1188 = vmatpush1.xpose.msra.mxu0 0.0
        %1189 = vmatprep.subr.mxu0 0.0
        %1190 = vmatpush1.xpose.msra.mxu0 0.0
        %1191 = vmatprep.subr.mxu0 0.0
        %1192 = vmatpush1.xpose.msra.mxu0 0.0
        %1193 = vmatprep.subr.mxu0 0.0
        %1194 = vmatpush1.xpose.msra.mxu0 0.0
        %1195 = vmatprep.subr.mxu0 0.0
        %1196 = vmatpush1.xpose.msra.mxu0 0.0
        %1197 = vmatprep.subr.mxu0 0.0
        %1198 = vmatpush1.xpose.msra.mxu0 0.0
        %1199 = vmatprep.subr.mxu0 0.0
        %1200 = vmatpush1.xpose.msra.mxu0 0.0
        %1201 = vmatprep.subr.mxu0 0.0
        %1202 = vmatpush1.xpose.msra.mxu0 0.0
        %1203 = vmatprep.subr.mxu0 0.0
        %1204 = vmatpush1.xpose.msra.mxu0 0.0
        %1205 = vmatprep.subr.mxu0 0.0
        %1206 = vmatpush1.xpose.msra.mxu0 0.0
        %1207 = vmatprep.subr.mxu0 0.0
        %1208 = vmatpush1.xpose.msra.mxu0 0.0
        %1209 = vmatprep.subr.mxu0 0.0
        %1210 = vmatpush1.xpose.msra.mxu0 0.0
        %1211 = vmatprep.subr.mxu0 0.0
        %1212 = vmatpush1.xpose.msra.mxu0 0.0
        %1213 = vmatprep.subr.mxu0 0.0
        %1214 = vmatpush1.xpose.msra.mxu0 0.0
        %1215 = vmatprep.subr.mxu0 0.0
        %1216 = vmatpush1.xpose.msra.mxu0 0.0
        %1217 = vmatprep.subr.mxu0 0.0
        %1218 = vmatpush1.xpose.msra.mxu0 0.0
        %1219 = vmatprep.subr.mxu0 0.0
        %1220 = vmatpush1.xpose.msra.mxu0 0.0
        %1221 = vmatprep.subr.mxu0 0.0
        %1222 = vmatpush1.xpose.msra.mxu0 0.0
        %1223 = vmatprep.subr.mxu0 0.0
        %1224 = vmatpush1.xpose.msra.mxu0 0.0
        %1225 = vmatprep.subr.mxu0 0.0
        %1226 = vmatpush1.xpose.msra.mxu0 0.0
        %1227 = vmatprep.subr.mxu0 0.0
        %1228 = vmatpush1.xpose.msra.mxu0 0.0
        %1229 = vmatprep.subr.mxu0 0.0
        %1230 = vmatpush1.xpose.msra.mxu0 0.0
        %1231 = vmatprep.subr.mxu0 0.0
        %1232 = vmatpush1.xpose.msra.mxu0 0.0
        %1233 = vmatprep.subr.mxu0 0.0
        %1234 = vmatpush1.xpose.msra.mxu0 0.0
        %1235 = vmatprep.subr.mxu0 0.0
        %1236 = vmatpush1.xpose.msra.mxu0 0.0
        %1237 = vmatprep.subr.mxu0 0.0
        %1238 = vmatpush1.xpose.msra.mxu0 0.0
        %1239 = vmatprep.subr.mxu0 0.0
        %1240 = vmatpush1.xpose.msra.mxu0 0.0
        %1241 = vmatprep.subr.mxu0 0.0
        %1242 = vmatpush1.xpose.msra.mxu0 0.0
        %1243 = vmatprep.subr.mxu0 0.0
        %1244 = vmatpush1.xpose.msra.mxu0 0.0
        %1245 = vmatprep.subr.mxu0 0.0
        %1246 = vmatpush1.xpose.msra.mxu0 0.0
        %1247 = vmatprep.subr.mxu0 0.0
        %1248 = vmatpush1.xpose.msra.mxu0 0.0
        %1249 = vmatprep.mubr.f32.mxu0 0.0
        %v1250 = vand.u32 %v201, 4294901760
        %1251 = vmatmul.mubr.f32.gmra.mrb[0].mxu0 %v1250
        %v1252 = vpop.f32.mrb[0].mxu0
        %v1253 = vadd.f32 %v1177, %v1252
        %v1254 = vpop.f32.mrb[0].mxu0
        %1255 = vdwg.mxu0
        %1256 = vmatprep.subr.mxu0 0.0
        %v1257 = vand.u32 %v201, 4294901760
        %v1258 = vsub.f32 %v201, %v1257
        %1259 = vmatpush1.xpose.msra.mxu0 %v1258
        %1260 = vmatprep.subr.mxu0 0.0
        %1261 = vmatpush1.xpose.msra.mxu0 0.0
        %1262 = vmatprep.subr.mxu0 0.0
        %1263 = vmatpush1.xpose.msra.mxu0 0.0
        %1264 = vmatprep.subr.mxu0 0.0
        %1265 = vmatpush1.xpose.msra.mxu0 0.0
        %1266 = vmatprep.subr.mxu0 0.0
        %1267 = vmatpush1.xpose.msra.mxu0 0.0
        %1268 = vmatprep.subr.mxu0 0.0
        %1269 = vmatpush1.xpose.msra.mxu0 0.0
        %1270 = vmatprep.subr.mxu0 0.0
        %1271 = vmatpush1.xpose.msra.mxu0 0.0
        %1272 = vmatprep.subr.mxu0 0.0
        %1273 = vmatpush1.xpose.msra.mxu0 0.0
        %1274 = vmatprep.subr.mxu0 0.0
        %1275 = vmatpush1.xpose.msra.mxu0 0.0
        %1276 = vmatprep.subr.mxu0 0.0
        %1277 = vmatpush1.xpose.msra.mxu0 0.0
        %1278 = vmatprep.subr.mxu0 0.0
        %1279 = vmatpush1.xpose.msra.mxu0 0.0
        %1280 = vmatprep.subr.mxu0 0.0
        %1281 = vmatpush1.xpose.msra.mxu0 0.0
        %1282 = vmatprep.subr.mxu0 0.0
        %1283 = vmatpush1.xpose.msra.mxu0 0.0
        %1284 = vmatprep.subr.mxu0 0.0
        %1285 = vmatpush1.xpose.msra.mxu0 0.0
        %1286 = vmatprep.subr.mxu0 0.0
        %1287 = vmatpush1.xpose.msra.mxu0 0.0
        %1288 = vmatprep.subr.mxu0 0.0
        %1289 = vmatpush1.xpose.msra.mxu0 0.0
        %1290 = vmatprep.subr.mxu0 0.0
        %1291 = vmatpush1.xpose.msra.mxu0 0.0
        %1292 = vmatprep.subr.mxu0 0.0
        %1293 = vmatpush1.xpose.msra.mxu0 0.0
        %1294 = vmatprep.subr.mxu0 0.0
        %1295 = vmatpush1.xpose.msra.mxu0 0.0
        %1296 = vmatprep.subr.mxu0 0.0
        %1297 = vmatpush1.xpose.msra.mxu0 0.0
        %1298 = vmatprep.subr.mxu0 0.0
        %1299 = vmatpush1.xpose.msra.mxu0 0.0
        %1300 = vmatprep.subr.mxu0 0.0
        %1301 = vmatpush1.xpose.msra.mxu0 0.0
        %1302 = vmatprep.subr.mxu0 0.0
        %1303 = vmatpush1.xpose.msra.mxu0 0.0
        %1304 = vmatprep.subr.mxu0 0.0
        %1305 = vmatpush1.xpose.msra.mxu0 0.0
        %1306 = vmatprep.subr.mxu0 0.0
        %1307 = vmatpush1.xpose.msra.mxu0 0.0
        %1308 = vmatprep.subr.mxu0 0.0
        %1309 = vmatpush1.xpose.msra.mxu0 0.0
        %1310 = vmatprep.subr.mxu0 0.0
        %1311 = vmatpush1.xpose.msra.mxu0 0.0
        %1312 = vmatprep.subr.mxu0 0.0
        %1313 = vmatpush1.xpose.msra.mxu0 0.0
        %1314 = vmatprep.subr.mxu0 0.0
        %1315 = vmatpush1.xpose.msra.mxu0 0.0
        %1316 = vmatprep.subr.mxu0 0.0
        %1317 = vmatpush1.xpose.msra.mxu0 0.0
        %1318 = vmatprep.subr.mxu0 0.0
        %1319 = vmatpush1.xpose.msra.mxu0 0.0
        %1320 = vmatprep.subr.mxu0 0.0
        %1321 = vmatpush1.xpose.msra.mxu0 0.0
        %1322 = vmatprep.mubr.f32.mxu0 0.0
        %v1323 = vand.u32 %v201, 4294901760
        %v1324 = vsub.f32 %v201, %v1323
        %1325 = vmatmul.mubr.f32.gmra.mrb[0].mxu0 %v1324
        %v1326 = vpop.f32.mrb[0].mxu0
        %v1327 = vadd.f32 %v1253, %v1326
        %v1328 = vpop.f32.mrb[0].mxu0
        %1329 = vdwg.mxu0
        %1330 = vmatprep.subr.mxu0 0.0
        %v1331 = vand.u32 %v201, 4294901760
        %1332 = vmatpush1.xpose.msra.mxu0 %v1331
        %1333 = vmatprep.subr.mxu0 0.0
        %1334 = vmatpush1.xpose.msra.mxu0 0.0
        %1335 = vmatprep.subr.mxu0 0.0
        %1336 = vmatpush1.xpose.msra.mxu0 0.0
        %1337 = vmatprep.subr.mxu0 0.0
        %1338 = vmatpush1.xpose.msra.mxu0 0.0
        %1339 = vmatprep.subr.mxu0 0.0
        %1340 = vmatpush1.xpose.msra.mxu0 0.0
        %1341 = vmatprep.subr.mxu0 0.0
        %1342 = vmatpush1.xpose.msra.mxu0 0.0
        %1343 = vmatprep.subr.mxu0 0.0
        %1344 = vmatpush1.xpose.msra.mxu0 0.0
        %1345 = vmatprep.subr.mxu0 0.0
        %1346 = vmatpush1.xpose.msra.mxu0 0.0
        %1347 = vmatprep.subr.mxu0 0.0
        %1348 = vmatpush1.xpose.msra.mxu0 0.0
        %1349 = vmatprep.subr.mxu0 0.0
        %1350 = vmatpush1.xpose.msra.mxu0 0.0
        %1351 = vmatprep.subr.mxu0 0.0
        %1352 = vmatpush1.xpose.msra.mxu0 0.0
        %1353 = vmatprep.subr.mxu0 0.0
        %1354 = vmatpush1.xpose.msra.mxu0 0.0
        %1355 = vmatprep.subr.mxu0 0.0
        %1356 = vmatpush1.xpose.msra.mxu0 0.0
        %1357 = vmatprep.subr.mxu0 0.0
        %1358 = vmatpush1.xpose.msra.mxu0 0.0
        %1359 = vmatprep.subr.mxu0 0.0
        %1360 = vmatpush1.xpose.msra.mxu0 0.0
        %1361 = vmatprep.subr.mxu0 0.0
        %1362 = vmatpush1.xpose.msra.mxu0 0.0
        %1363 = vmatprep.subr.mxu0 0.0
        %1364 = vmatpush1.xpose.msra.mxu0 0.0
        %1365 = vmatprep.subr.mxu0 0.0
        %1366 = vmatpush1.xpose.msra.mxu0 0.0
        %1367 = vmatprep.subr.mxu0 0.0
        %1368 = vmatpush1.xpose.msra.mxu0 0.0
        %1369 = vmatprep.subr.mxu0 0.0
        %1370 = vmatpush1.xpose.msra.mxu0 0.0
        %1371 = vmatprep.subr.mxu0 0.0
        %1372 = vmatpush1.xpose.msra.mxu0 0.0
        %1373 = vmatprep.subr.mxu0 0.0
        %1374 = vmatpush1.xpose.msra.mxu0 0.0
        %1375 = vmatprep.subr.mxu0 0.0
        %1376 = vmatpush1.xpose.msra.mxu0 0.0
        %1377 = vmatprep.subr.mxu0 0.0
        %1378 = vmatpush1.xpose.msra.mxu0 0.0
        %1379 = vmatprep.subr.mxu0 0.0
        %1380 = vmatpush1.xpose.msra.mxu0 0.0
        %1381 = vmatprep.subr.mxu0 0.0
        %1382 = vmatpush1.xpose.msra.mxu0 0.0
        %1383 = vmatprep.subr.mxu0 0.0
        %1384 = vmatpush1.xpose.msra.mxu0 0.0
        %1385 = vmatprep.subr.mxu0 0.0
        %1386 = vmatpush1.xpose.msra.mxu0 0.0
        %1387 = vmatprep.subr.mxu0 0.0
        %1388 = vmatpush1.xpose.msra.mxu0 0.0
        %1389 = vmatprep.subr.mxu0 0.0
        %1390 = vmatpush1.xpose.msra.mxu0 0.0
        %1391 = vmatprep.subr.mxu0 0.0
        %1392 = vmatpush1.xpose.msra.mxu0 0.0
        %1393 = vmatprep.subr.mxu0 0.0
        %1394 = vmatpush1.xpose.msra.mxu0 0.0
        %1395 = vmatprep.mubr.f32.mxu0 0.0
        %v1396 = vand.u32 %v201, 4294901760
        %v1397 = vsub.f32 %v201, %v1396
        %v1398 = vand.u32 %v1397, 4294901760
        %1399 = vmatmul.mubr.f32.gmra.mrb[0].mxu0 %v1398
        %v1400 = vpop.f32.mrb[0].mxu0
        %v1401 = vadd.f32 %v1327, %v1400
        %v1402 = vpop.f32.mrb[0].mxu0
        %1403 = vdwg.mxu0
        %1404 = vmatprep.subr.mxu0 0.0
        %v1405 = vand.u32 %v201, 4294901760
        %v1406 = vsub.f32 %v201, %v1405
        %v1407 = vand.u32 %v1406, 4294901760
        %1408 = vmatpush1.xpose.msra.mxu0 %v1407
        %1409 = vmatprep.subr.mxu0 0.0
        %1410 = vmatpush1.xpose.msra.mxu0 0.0
        %1411 = vmatprep.subr.mxu0 0.0
        %1412 = vmatpush1.xpose.msra.mxu0 0.0
        %1413 = vmatprep.subr.mxu0 0.0
        %1414 = vmatpush1.xpose.msra.mxu0 0.0
        %1415 = vmatprep.subr.mxu0 0.0
        %1416 = vmatpush1.xpose.msra.mxu0 0.0
        %1417 = vmatprep.subr.mxu0 0.0
        %1418 = vmatpush1.xpose.msra.mxu0 0.0
        %1419 = vmatprep.subr.mxu0 0.0
        %1420 = vmatpush1.xpose.msra.mxu0 0.0
        %1421 = vmatprep.subr.mxu0 0.0
        %1422 = vmatpush1.xpose.msra.mxu0 0.0
        %1423 = vmatprep.subr.mxu0 0.0
        %1424 = vmatpush1.xpose.msra.mxu0 0.0
        %1425 = vmatprep.subr.mxu0 0.0
        %1426 = vmatpush1.xpose.msra.mxu0 0.0
        %1427 = vmatprep.subr.mxu0 0.0
        %1428 = vmatpush1.xpose.msra.mxu0 0.0
        %1429 = vmatprep.subr.mxu0 0.0
        %1430 = vmatpush1.xpose.msra.mxu0 0.0
        %1431 = vmatprep.subr.mxu0 0.0
        %1432 = vmatpush1.xpose.msra.mxu0 0.0
        %1433 = vmatprep.subr.mxu0 0.0
        %1434 = vmatpush1.xpose.msra.mxu0 0.0
        %1435 = vmatprep.subr.mxu0 0.0
        %1436 = vmatpush1.xpose.msra.mxu0 0.0
        %1437 = vmatprep.subr.mxu0 0.0
        %1438 = vmatpush1.xpose.msra.mxu0 0.0
        %1439 = vmatprep.subr.mxu0 0.0
        %1440 = vmatpush1.xpose.msra.mxu0 0.0
        %1441 = vmatprep.subr.mxu0 0.0
        %1442 = vmatpush1.xpose.msra.mxu0 0.0
        %1443 = vmatprep.subr.mxu0 0.0
        %1444 = vmatpush1.xpose.msra.mxu0 0.0
        %1445 = vmatprep.subr.mxu0 0.0
        %1446 = vmatpush1.xpose.msra.mxu0 0.0
        %1447 = vmatprep.subr.mxu0 0.0
        %1448 = vmatpush1.xpose.msra.mxu0 0.0
        %1449 = vmatprep.subr.mxu0 0.0
        %1450 = vmatpush1.xpose.msra.mxu0 0.0
        %1451 = vmatprep.subr.mxu0 0.0
        %1452 = vmatpush1.xpose.msra.mxu0 0.0
        %1453 = vmatprep.subr.mxu0 0.0
        %1454 = vmatpush1.xpose.msra.mxu0 0.0
        %1455 = vmatprep.subr.mxu0 0.0
        %1456 = vmatpush1.xpose.msra.mxu0 0.0
        %1457 = vmatprep.subr.mxu0 0.0
        %1458 = vmatpush1.xpose.msra.mxu0 0.0
        %1459 = vmatprep.subr.mxu0 0.0
        %1460 = vmatpush1.xpose.msra.mxu0 0.0
        %1461 = vmatprep.subr.mxu0 0.0
        %1462 = vmatpush1.xpose.msra.mxu0 0.0
        %1463 = vmatprep.subr.mxu0 0.0
        %1464 = vmatpush1.xpose.msra.mxu0 0.0
        %1465 = vmatprep.subr.mxu0 0.0
        %1466 = vmatpush1.xpose.msra.mxu0 0.0
        %1467 = vmatprep.subr.mxu0 0.0
        %1468 = vmatpush1.xpose.msra.mxu0 0.0
        %1469 = vmatprep.subr.mxu0 0.0
        %1470 = vmatpush1.xpose.msra.mxu0 0.0
        %1471 = vmatprep.mubr.f32.mxu0 0.0
        %v1472 = vand.u32 %v201, 4294901760
        %1473 = vmatmul.mubr.f32.gmra.mrb[0].mxu0 %v1472
        %v1474 = vpop.f32.mrb[0].mxu0
        %v1475 = vadd.f32 %v1401, %v1474
        %v1476 = vpop.f32.mrb[0].mxu0
        %1477 = vdwg.mxu0
        %1478 = vmatprep.subr.mxu0 0.0
        %v1479 = vand.u32 %v201, 4294901760
        %1480 = vmatpush1.xpose.msra.mxu0 %v1479
        %1481 = vmatprep.subr.mxu0 0.0
        %1482 = vmatpush1.xpose.msra.mxu0 0.0
        %1483 = vmatprep.subr.mxu0 0.0
        %1484 = vmatpush1.xpose.msra.mxu0 0.0
        %1485 = vmatprep.subr.mxu0 0.0
        %1486 = vmatpush1.xpose.msra.mxu0 0.0
        %1487 = vmatprep.subr.mxu0 0.0
        %1488 = vmatpush1.xpose.msra.mxu0 0.0
        %1489 = vmatprep.subr.mxu0 0.0
        %1490 = vmatpush1.xpose.msra.mxu0 0.0
        %1491 = vmatprep.subr.mxu0 0.0
        %1492 = vmatpush1.xpose.msra.mxu0 0.0
        %1493 = vmatprep.subr.mxu0 0.0
        %1494 = vmatpush1.xpose.msra.mxu0 0.0
        %1495 = vmatprep.subr.mxu0 0.0
        %1496 = vmatpush1.xpose.msra.mxu0 0.0
        %1497 = vmatprep.subr.mxu0 0.0
        %1498 = vmatpush1.xpose.msra.mxu0 0.0
        %1499 = vmatprep.subr.mxu0 0.0
        %1500 = vmatpush1.xpose.msra.mxu0 0.0
        %1501 = vmatprep.subr.mxu0 0.0
        %1502 = vmatpush1.xpose.msra.mxu0 0.0
        %1503 = vmatprep.subr.mxu0 0.0
        %1504 = vmatpush1.xpose.msra.mxu0 0.0
        %1505 = vmatprep.subr.mxu0 0.0
        %1506 = vmatpush1.xpose.msra.mxu0 0.0
        %1507 = vmatprep.subr.mxu0 0.0
        %1508 = vmatpush1.xpose.msra.mxu0 0.0
        %1509 = vmatprep.subr.mxu0 0.0
        %1510 = vmatpush1.xpose.msra.mxu0 0.0
        %1511 = vmatprep.subr.mxu0 0.0
        %1512 = vmatpush1.xpose.msra.mxu0 0.0
        %1513 = vmatprep.subr.mxu0 0.0
        %1514 = vmatpush1.xpose.msra.mxu0 0.0
        %1515 = vmatprep.subr.mxu0 0.0
        %1516 = vmatpush1.xpose.msra.mxu0 0.0
        %1517 = vmatprep.subr.mxu0 0.0
        %1518 = vmatpush1.xpose.msra.mxu0 0.0
        %1519 = vmatprep.subr.mxu0 0.0
        %1520 = vmatpush1.xpose.msra.mxu0 0.0
        %1521 = vmatprep.subr.mxu0 0.0
        %1522 = vmatpush1.xpose.msra.mxu0 0.0
        %1523 = vmatprep.subr.mxu0 0.0
        %1524 = vmatpush1.xpose.msra.mxu0 0.0
        %1525 = vmatprep.subr.mxu0 0.0
        %1526 = vmatpush1.xpose.msra.mxu0 0.0
        %1527 = vmatprep.subr.mxu0 0.0
        %1528 = vmatpush1.xpose.msra.mxu0 0.0
        %1529 = vmatprep.subr.mxu0 0.0
        %1530 = vmatpush1.xpose.msra.mxu0 0.0
        %1531 = vmatprep.subr.mxu0 0.0
        %1532 = vmatpush1.xpose.msra.mxu0 0.0
        %1533 = vmatprep.subr.mxu0 0.0
        %1534 = vmatpush1.xpose.msra.mxu0 0.0
        %1535 = vmatprep.subr.mxu0 0.0
        %1536 = vmatpush1.xpose.msra.mxu0 0.0
        %1537 = vmatprep.subr.mxu0 0.0
        %1538 = vmatpush1.xpose.msra.mxu0 0.0
        %1539 = vmatprep.subr.mxu0 0.0
        %1540 = vmatpush1.xpose.msra.mxu0 0.0
        %1541 = vmatprep.subr.mxu0 0.0
        %1542 = vmatpush1.xpose.msra.mxu0 0.0
        %1543 = vmatprep.mubr.f32.mxu0 0.0
        %v1544 = vand.u32 %v201, 4294901760
        %1545 = vmatmul.mubr.f32.gmra.mrb[0].mxu0 %v1544
        %v1546 = vpop.f32.mrb[0].mxu0
        %v1547 = vadd.f32 %v1475, %v1546
        %v1548 = vpop.f32.mrb[0].mxu0
        %1549 = vdwg.mxu0
        %vm1550 = vcmp.lt.f32.partialorder %v1101, 0.999999
        %vm1551 = vcmp.lt.f32.partialorder %v1547, 0.999999
        %vm1552 = vcmp.gt.f32.partialorder %v1101, 0.7
        %vm1553 = vmand %vm1552, %vm1550
        %vm1554 = vcmp.gt.f32.partialorder %v1101, 0.8
        %vm1555 = vmand %vm1554, %vm1550
        %vm1556 = vcmp.gt.f32.partialorder %v1547, 0.7
        %vm1557 = vmand %vm1556, %vm1551
        %vm1558 = vcmp.gt.f32.partialorder %v1547, 0.8
        %vm1559 = vmand %vm1558, %vm1551
        %vm1560 = vmor %vm1553, %vm1559
        %v1561 = vsel %vm1560, 0.0, %v646
        %vm1562 = vmor %vm1557, %vm1555
        %v1563 = vsel %vm1562, 0.0, %v646
        %v1564 = vmul.f32 %v194, %v194
        %v1565 = vsel %vm196, %v1564, 0.0
        %1566 = vadd.xlane.f32.xlu0 %v1565
        %v1567 = vpop.xlane.xlu0 %1566
        %v1568 = vmul.f32 %v195, %v195
        %v1569 = vsel %vm196, %v1568, 0.0
        %1570 = vadd.xlane.f32.xlu0 %v1569
        %v1571 = vpop.xlane.xlu0 %1570
        %vm1572 = vcmp.lt.f32.partialorder %v1567, 0.999999
        %vm1573 = vcmp.lt.f32.partialorder %v1571, 0.999999
        %vm1574 = vcmp.gt.f32.partialorder %v1567, 0.7
        %vm1575 = vmand %vm1574, %vm1572
        %vm1576 = vcmp.gt.f32.partialorder %v1571, 0.8
        %vm1577 = vmand %vm1576, %vm1573
        %vm1578 = vmor %vm1575, %vm1577
        %vm1579 = vcmp.gt.f32.partialorder %v1571, 0.7
        %vm1580 = vmand %vm1579, %vm1573
        %vm1581 = vcmp.gt.f32.partialorder %v1567, 0.8
        %vm1582 = vmand %vm1581, %vm1572
        %vm1583 = vmor %vm1580, %vm1582
        %v1584 = vsel %vm1578, 0.0, %v657
        %v1585 = vsel %vm1583, 0.0, %v657
        %v1586 = vsel %vm653, %v1585, 0.0
        %vm1587 = vcmask 64512
        %v1588 = vsel %vm1587, %v1586, 0.0
        %v1589 = vrot.slane %v1588, 4
        %v1590 = vadd.f32 %v1588, %v1589
        %v1591 = vrot.slane %v1590, 2
        %v1592 = vadd.f32 %v1590, %v1591
        %v1593 = vrot.slane %v1592, 1
        %v1594 = vadd.f32 %v1592, %v1593
        %v1595 = vadd.f32 %v1561, 0.2
        %v1596 = vsub.f32 %v1595, %v1584
        %v1597 = vmax.f32 %v1596, 0.0
        %v1598 = vsel %vm653, 0.0, %v1597
        %v1599 = vsel %vm1587, %v1598, -inf
        %1600 = vmax.xlane.f32.xlu0 %v1599
        %v1601 = vpop.xlane.xlu0 %1600
        %v1602 = vadd.f32 %v1563, 0.2
        %v1603 = vsub.f32 %v1602, %v1594
        %v1604 = vmax.f32 %v1603, 0.0
        %v1605 = vsel %vm653, 0.0, %v1604
        %v1606 = vsel %vm1587, %v1605, -inf
        %v1607 = vrot.slane %v1606, 4
        %v1608 = vmax.f32 %v1606, %v1607
        %v1609 = vrot.slane %v1608, 2
        %v1610 = vmax.f32 %v1608, %v1609
        %v1611 = vrot.slane %v1610, 1
        %v1612 = vmax.f32 %v1610, %v1611
        %vm1613 = vcmask 7168
        %v1614 = vsel %vm1613, %v1601, 0.0
        %1615 = vadd.xlane.f32.xlu0 %v1614
        %v1616 = vpop.xlane.xlu0 %1615
        %v1617 = vrot.slane %v1616, 4
        %v1618 = vadd.f32 %v1616, %v1617
        %v1619 = vrot.slane %v1618, 2
        %v1620 = vadd.f32 %v1618, %v1619
        %v1621 = vrot.slane %v1620, 1
        %v1622 = vadd.f32 %v1620, %v1621
        %s1623 = vtos %v1622
        %v1624 = vstv %s1623
        %vm1625 = vcmask 57344
        %v1626 = vsel %vm1625, %v1612, 0.0
        %1627 = vadd.xlane.f32.xlu0 %v1626
        %v1628 = vpop.xlane.xlu0 %1627
        %v1629 = vrot.slane %v1628, 4
        %v1630 = vadd.f32 %v1628, %v1629
        %v1631 = vrot.slane %v1630, 2
        %v1632 = vadd.f32 %v1630, %v1631
        %v1633 = vrot.slane %v1632, 1
        %v1634 = vadd.f32 %v1632, %v1633
        %s1635 = vtos %v1634
        %v1636 = vstv %s1635
        %v1637 = vadd.f32 %v1624, %v1636
        %v1638 = vmul.f32 %v1637, 0.5
        %vm1639 = vcmask 0
        %1640 = vst.msk [vmem:[%s193] sm:$0x1] %vm1639, %v1638
        %p1641 = scmp.lt.s32.totalorder %s19, 3
        %s1642 = scalar_select %p1641, %s19, 3
        %s1643 = scalar_lea.vmem %s2, %s1642
        // Predicated region
        $region37: #{tpu_custom_call.1} parent=27 // pred_check
          %p1644 = pneg %p89
        $region38: #{tpu_custom_call.1} parent=27 // pred_check_branch
          %1646 = sbr.rel (%p1644) target = $region40
        $region39: #{tpu_custom_call.1} parent=27 // pred_region
          _
        $region40: #{tpu_custom_call.1} parent=27 // pred_fallthru
          _
      $region28: #{tpu_custom_call.1} parent=5 // pred_fallthru
        _
      %p1647 = scmp.le.s32.totalorder 2, %s14
      // Predicated region
      $region41: #{tpu_custom_call.1} parent=5 // pred_check
        %p1648 = pneg %p1647
      $region42: #{tpu_custom_call.1} parent=5 // pred_check_branch
        %1650 = sbr.rel (%p1648) target = $region44
      $region43: #{tpu_custom_call.1} parent=5 // pred_region
        %s1651 = ssub.s32 %s14, 2
        // Predicated region
        $region45: #{tpu_custom_call.1} parent=43 // pred_check
          %p1652 = pneg %p95
        $region46: #{tpu_custom_call.1} parent=43 // pred_check_branch
          %1654 = sbr.rel (%p1652) target = $region48
        $region47: #{tpu_custom_call.1} parent=43 // pred_region
          %p1655 = scmp.lt.s32.totalorder %s20, 3
          %s1656 = scalar_select %p1655, %s20, 3
          %s1657 = scalar_lea.vmem %s2, %s1656
        $region48: #{tpu_custom_call.1} parent=43 // pred_fallthru
          _
      $region44: #{tpu_custom_call.1} parent=5 // pred_fallthru
        _
    $region6: #{tpu_custom_call.1} parent=1 // loop_footer
      %s18 = sadd.s32 1, %s14
    $region7: #{tpu_custom_call.1} parent=1 // loop_footer_branch
      %13 = sbr.rel target = $region3
    $region8: #{tpu_custom_call.1} parent=1 // loop_exit
      _
    %1658 = vsyncpa [#allocation3], 1
    %s1659 = scalar_lea.sflag [#allocation3], 1
    %1660 = vsyncpa %s1659, 1
    %1661 = vsyncpa [#allocation5], 1
    %s1662 = scalar_lea.sflag [#allocation5], 1
    %1663 = vsyncpa %s1662, 1

</llo_original>
